<compile_context>
chip_gen: v6e
topology: v6e:2x2x1
jax: 0.10.0
libtpu: 0.0.40
codegen_flags: <defaults>
</compile_context>

<pallas_src>
import functools

import jax
import jax.numpy as jnp
from jax.experimental import pallas as pl
from jax.experimental.pallas import tpu as pltpu


def _depthwise3x3(h, taps, y_idx, x_idx, n_y, n_x):
    """Depthwise 3x3 conv with zero padding on a tokens-on-lane tile.

    h:     (Ch, T) f32, tokens flattened as (image, y, x) along the lane axis.
    taps:  (Ch, 9) f32, tap k corresponds to spatial offset (dy, dx) = (k//3 - 1, k%3 - 1).
    y_idx, x_idx: (1, T) int32 spatial coordinates of every token.
    """
    T = h.shape[1]
    # Center tap: no shift, no mask.
    acc = h * taps[:, 4:5]
    for k in (0, 1, 2, 3, 5, 6, 7, 8):          # static unroll, 8 off-center taps
        sy, sx = k // 3 - 1, k % 3 - 1
        off = sy * n_x + sx
        # rolled[t] = h[(t + off) % T]; combined with the edge mask below this is
        # exactly the zero-padded neighbour h[y+sy, x+sx] (wrapped positions masked).
        rolled = pltpu.roll(h, (-off) % T, 1)
        valid = ((y_idx + sy >= 0) & (y_idx + sy < n_y) &
                 (x_idx + sx >= 0) & (x_idx + sx < n_x))
        acc = acc + jnp.where(valid, rolled, 0.0) * taps[:, k:k + 1]
    return acc


def mixffn_kernel(x_ref, yid_ref, xid_ref,
                  w1g_ref, w1v_ref, b1g_ref, b1v_ref,
                  dwg_ref, dwv_ref, b2g_ref, b2v_ref,
                  w3_ref, b3_ref, o_ref, *, n_y, n_x):
    # x_ref : (D, T)     T = batch_tile * n_y * n_x tokens on the lane axis
    # yid/xid: (1, T)    int32 spatial coordinates of each token
    # w1g/w1v: (Ch, D), b1g/b1v: (Ch, 1)   gate / value halves of conv_1 (1x1)
    # dwg/dwv: (Ch, 9), b2g/b2v: (Ch, 1)   gate / value halves of depthwise conv_2
    # w3    : (D, Ch),  b3    : (D, 1)     conv_3 (1x1)
    # o_ref : (D, T)
    x = x_ref[...].astype(jnp.float32)
    y_idx = yid_ref[...]
    x_idx = xid_ref[...]

    # conv_1 (1x1) == channel matmul; lane-dense (Ch, T) MXU outputs.
    h1g = jnp.dot(w1g_ref[...], x, preferred_element_type=jnp.float32) + b1g_ref[...]
    h1v = jnp.dot(w1v_ref[...], x, preferred_element_type=jnp.float32) + b1v_ref[...]

    # conv_2: depthwise 3x3 with zero padding (lane rolls + edge masks).
    h2g = _depthwise3x3(h1g, dwg_ref[...], y_idx, x_idx, n_y, n_x) + b2g_ref[...]
    h2v = _depthwise3x3(h1v, dwv_ref[...], y_idx, x_idx, n_y, n_x) + b2v_ref[...]

    # chunk(2, dim=channels) -> gate, value;  value * relu(gate)
    g = jnp.maximum(h2g, 0.0) * h2v

    # conv_3 (1x1) == channel matmul; lane-dense (D, T) output store.
    out = jnp.dot(w3_ref[...], g, preferred_element_type=jnp.float32) + b3_ref[...]
    o_ref[...] = out.astype(o_ref.dtype)


def mixffn(x, params, n_y, n_x):
    """x: (B, N, D) with N = n_y * n_x (n_y major). Returns (B, N, D)."""
    B, Ntok, D = x.shape
    N = n_y * n_x
    assert Ntok == N
    w1, b1, dw, b2, w3, b3 = params
    C = w1.shape[1]
    Ch = C // 2

    # ---- layout plumbing (outside the kernel): tokens on the lane axis ----
    xt = x.reshape(B * N, D).T                       # (D, B*N)

    # ---- pre-split gate/value halves; transpose to (out_ch, in_ch) / column biases ----
    w1t, dwt = w1.T, dw.T                            # (C, D), (C, 9)
    b1c, b2c = b1.reshape(C, 1), b2.reshape(C, 1)
    w1g, w1v = w1t[:Ch], w1t[Ch:]
    dwg, dwv = dwt[:Ch], dwt[Ch:]
    b1g, b1v = b1c[:Ch], b1c[Ch:]
    b2g, b2v = b2c[:Ch], b2c[Ch:]
    w3t = w3.T                                       # (D, Ch)
    b3c = b3.reshape(D, 1)                           # (D, 1)

    # ---- batch-chunked grid: smallest chunk whose token count is a multiple of 128 ----
    bt = B
    for cand in range(1, B + 1):
        if B % cand == 0 and (cand * N) % 128 == 0:
            bt = cand
            break
    Tblk = bt * N
    grid = (B // bt,)

    # Per-token spatial coordinates (identical for every chunk: chunks start on image
    # boundaries), precomputed outside the kernel.
    tok = jnp.arange(Tblk, dtype=jnp.int32)
    pos = tok % N
    yid = (pos // n_x).reshape(1, Tblk)
    xid = (pos % n_x).reshape(1, Tblk)

    def full(a):
        nd = a.ndim
        return pl.BlockSpec(a.shape, lambda g, nd=nd: (0,) * nd)

    kernel = functools.partial(mixffn_kernel, n_y=n_y, n_x=n_x)

    out_t = pl.pallas_call(
        kernel,
        out_shape=jax.ShapeDtypeStruct((D, B * N), x.dtype),
        grid_spec=pltpu.PrefetchScalarGridSpec(
            num_scalar_prefetch=0,
            grid=grid,
            in_specs=[
                pl.BlockSpec((D, Tblk), lambda g: (0, g)),
                full(yid), full(xid),
                full(w1g), full(w1v), full(b1g), full(b1v),
                full(dwg), full(dwv), full(b2g), full(b2v),
                full(w3t), full(b3c),
            ],
            out_specs=pl.BlockSpec((D, Tblk), lambda g: (0, g)),
        ),
        compiler_params=pltpu.CompilerParams(
            dimension_semantics=("parallel",)),      # batch chunks independent (v7x 2 TCs)
    )(xt, yid, xid, w1g, w1v, b1g, b1v, dwg, dwv, b2g, b2v, w3t, b3c)

    return out_t.T.reshape(B, N, D)


def mixffn_ref(x, params, n_y, n_x):
    """Pure-JAX reference using lax.conv (same semantics as the PyTorch module)."""
    w1, b1, dw, b2, w3, b3 = params
    B, N, D = x.shape
    C = w1.shape[1]
    dn = ("NHWC", "HWIO", "NHWC")
    xi = x.reshape(B, n_y, n_x, D)
    h1 = jax.lax.conv_general_dilated(xi, w1.reshape(1, 1, D, C), (1, 1), "VALID",
                                      dimension_numbers=dn) + b1.reshape(1, 1, 1, C)
    h2 = jax.lax.conv_general_dilated(h1, dw.reshape(3, 3, 1, C), (1, 1), "SAME",
                                      dimension_numbers=dn,
                                      feature_group_count=C) + b2.reshape(1, 1, 1, C)
    gate, val = h2[..., :C // 2], h2[..., C // 2:]
    g = jnp.maximum(gate, 0.0) * val
    out = jax.lax.conv_general_dilated(g, w3.reshape(1, 1, C // 2, D), (1, 1), "VALID",
                                       dimension_numbers=dn) + b3.reshape(1, 1, 1, D)
    return out.reshape(B, N, D)


if __name__ == "__main__":
    # ModelConfig: d_model=8, sample_size//patch_size = 8  ->  N = 64, dim_middle = 32
    B, D = 2, 8
    n_y = n_x = 8
    N = n_y * n_x
    C = 4 * D

    key = jax.random.PRNGKey(0)
    ks = jax.random.split(key, 7)
    x = jax.random.normal(ks[0], (B, N, D), jnp.float32)
    # Deterministic synthetic parameters (shapes from the module's __init__):
    #   conv_1: (C, D, 1, 1) -> w1 (D, C);  conv_2: (C, 1, 3, 3) -> dw (9, C)
    #   conv_3: (D, C//2, 1, 1) -> w3 (C//2, D)
    w1 = jax.random.normal(ks[1], (D, C), jnp.float32) * 0.1
    b1 = jax.random.normal(ks[2], (1, C), jnp.float32) * 0.1
    dw = jax.random.normal(ks[3], (9, C), jnp.float32) * 0.1
    b2 = jax.random.normal(ks[4], (1, C), jnp.float32) * 0.1
    w3 = jax.random.normal(ks[5], (C // 2, D), jnp.float32) * 0.1
    b3 = jax.random.normal(ks[6], (1, D), jnp.float32) * 0.1
    params = (w1, b1, dw, b2, w3, b3)

    out = jax.block_until_ready(mixffn(x, params, n_y, n_x))
    ref = mixffn_ref(x, params, n_y, n_x)

    assert out.shape == (B, N, D)
    assert jnp.allclose(out, ref, atol=1e-4, rtol=1e-4), float(jnp.max(jnp.abs(out - ref)))
    print("KERNEL_OK")
</pallas_src>

<mosaic_0001>
module attributes {stable_mosaic.version = 11 : i64} {
  func.func @mixffn_kernel(%arg0: i32, %arg1: memref<8x128xf32, #tpu.memory_space<vmem>>, %arg2: memref<1x128xi32, #tpu.memory_space<vmem>>, %arg3: memref<1x128xi32, #tpu.memory_space<vmem>>, %arg4: memref<16x8xf32, #tpu.memory_space<vmem>>, %arg5: memref<16x8xf32, #tpu.memory_space<vmem>>, %arg6: memref<16x1xf32, #tpu.memory_space<vmem>>, %arg7: memref<16x1xf32, #tpu.memory_space<vmem>>, %arg8: memref<16x9xf32, #tpu.memory_space<vmem>>, %arg9: memref<16x9xf32, #tpu.memory_space<vmem>>, %arg10: memref<16x1xf32, #tpu.memory_space<vmem>>, %arg11: memref<16x1xf32, #tpu.memory_space<vmem>>, %arg12: memref<8x16xf32, #tpu.memory_space<vmem>>, %arg13: memref<8x1xf32, #tpu.memory_space<vmem>>, %arg14: memref<8x128xf32, #tpu.memory_space<vmem>>) attributes {dimension_semantics = [#tpu.dimension_semantics<parallel>], iteration_bounds = array<i64: 1>, scalar_prefetch = 0 : i64, scratch_operands = 0 : i64, tpu.core_type = #tpu.core_type<tc>, window_params = [{transform_indices = @transform_0, window_bounds = array<i64: 8, 128>}, {pipeline_mode = #tpu.pipeline_mode<synchronous>, transform_indices = @transform_1, window_bounds = array<i64: 1, 128>}, {pipeline_mode = #tpu.pipeline_mode<synchronous>, transform_indices = @transform_2, window_bounds = array<i64: 1, 128>}, {pipeline_mode = #tpu.pipeline_mode<synchronous>, transform_indices = @transform_3, window_bounds = array<i64: 16, 8>}, {pipeline_mode = #tpu.pipeline_mode<synchronous>, transform_indices = @transform_4, window_bounds = array<i64: 16, 8>}, {pipeline_mode = #tpu.pipeline_mode<synchronous>, transform_indices = @transform_5, window_bounds = array<i64: 16, 1>}, {pipeline_mode = #tpu.pipeline_mode<synchronous>, transform_indices = @transform_6, window_bounds = array<i64: 16, 1>}, {pipeline_mode = #tpu.pipeline_mode<synchronous>, transform_indices = @transform_7, window_bounds = array<i64: 16, 9>}, {pipeline_mode = #tpu.pipeline_mode<synchronous>, transform_indices = @transform_8, window_bounds = array<i64: 16, 9>}, {pipeline_mode = #tpu.pipeline_mode<synchronous>, transform_indices = @transform_9, window_bounds = array<i64: 16, 1>}, {pipeline_mode = #tpu.pipeline_mode<synchronous>, transform_indices = @transform_10, window_bounds = array<i64: 16, 1>}, {pipeline_mode = #tpu.pipeline_mode<synchronous>, transform_indices = @transform_11, window_bounds = array<i64: 8, 16>}, {pipeline_mode = #tpu.pipeline_mode<synchronous>, transform_indices = @transform_12, window_bounds = array<i64: 8, 1>}, {transform_indices = @transform_13, window_bounds = array<i64: 8, 128>}]} {
    %c0 = arith.constant 0 : index
    %c0_0 = arith.constant 0 : index
    %0 = vector.load %arg1[%c0, %c0_0] : memref<8x128xf32, #tpu.memory_space<vmem>>, vector<8x128xf32>
    %c0_1 = arith.constant 0 : index
    %c0_2 = arith.constant 0 : index
    %1 = vector.load %arg2[%c0_1, %c0_2] : memref<1x128xi32, #tpu.memory_space<vmem>>, vector<1x128xi32>
    %c0_3 = arith.constant 0 : index
    %c0_4 = arith.constant 0 : index
    %2 = vector.load %arg3[%c0_3, %c0_4] : memref<1x128xi32, #tpu.memory_space<vmem>>, vector<1x128xi32>
    %c0_5 = arith.constant 0 : index
    %c0_6 = arith.constant 0 : index
    %3 = vector.load %arg4[%c0_5, %c0_6] : memref<16x8xf32, #tpu.memory_space<vmem>>, vector<16x8xf32>
    %cst = arith.constant dense<0.000000e+00> : vector<16x128xf32>
    %4 = tpu.matmul %3, %0, %cst {dimension_numbers = #tpu.dot_dimension_numbers<[1], [0], [0], [1], [0, 0, 1, 1], [], []>} : vector<16x8xf32>, vector<8x128xf32>, vector<16x128xf32> -> vector<16x128xf32>
    %c0_7 = arith.constant 0 : index
    %c0_8 = arith.constant 0 : index
    %5 = vector.load %arg6[%c0_7, %c0_8] : memref<16x1xf32, #tpu.memory_space<vmem>>, vector<16x1xf32>
    %6 = vector.broadcast %5 : vector<16x1xf32> to vector<16x128xf32>
    %7 = arith.addf %4, %6 : vector<16x128xf32>
    %c0_9 = arith.constant 0 : index
    %c0_10 = arith.constant 0 : index
    %8 = vector.load %arg5[%c0_9, %c0_10] : memref<16x8xf32, #tpu.memory_space<vmem>>, vector<16x8xf32>
    %cst_11 = arith.constant dense<0.000000e+00> : vector<16x128xf32>
    %9 = tpu.matmul %8, %0, %cst_11 {dimension_numbers = #tpu.dot_dimension_numbers<[1], [0], [0], [1], [0, 0, 1, 1], [], []>} : vector<16x8xf32>, vector<8x128xf32>, vector<16x128xf32> -> vector<16x128xf32>
    %c0_12 = arith.constant 0 : index
    %c0_13 = arith.constant 0 : index
    %10 = vector.load %arg7[%c0_12, %c0_13] : memref<16x1xf32, #tpu.memory_space<vmem>>, vector<16x1xf32>
    %11 = vector.broadcast %10 : vector<16x1xf32> to vector<16x128xf32>
    %12 = arith.addf %9, %11 : vector<16x128xf32>
    %c0_14 = arith.constant 0 : index
    %c0_15 = arith.constant 0 : index
    %13 = vector.load %arg8[%c0_14, %c0_15] : memref<16x9xf32, #tpu.memory_space<vmem>>, vector<16x9xf32>
    %14 = vector.extract_strided_slice %13 {offsets = [0, 4], sizes = [16, 1], strides = [1, 1]} : vector<16x9xf32> to vector<16x1xf32>
    %15 = vector.broadcast %14 : vector<16x1xf32> to vector<16x128xf32>
    %16 = arith.mulf %7, %15 : vector<16x128xf32>
    %c9_i32 = arith.constant 9 : i32
    %17 = tpu.dynamic_rotate %7 by %c9_i32 dim 1 : vector<16x128xf32>, i32 -> vector<16x128xf32>
    %c-1_i32 = arith.constant -1 : i32
    %18 = vector.broadcast %c-1_i32 : i32 to vector<1x128xi32>
    %19 = arith.addi %1, %18 : vector<1x128xi32>
    %c0_i32 = arith.constant 0 : i32
    %20 = vector.broadcast %c0_i32 : i32 to vector<1x128xi32>
    %21 = arith.cmpi sge, %19, %20 : vector<1x128xi32>
    %c-1_i32_16 = arith.constant -1 : i32
    %22 = vector.broadcast %c-1_i32_16 : i32 to vector<1x128xi32>
    %23 = arith.addi %1, %22 : vector<1x128xi32>
    %c8_i32 = arith.constant 8 : i32
    %24 = vector.broadcast %c8_i32 : i32 to vector<1x128xi32>
    %25 = arith.cmpi slt, %23, %24 : vector<1x128xi32>
    %26 = arith.andi %21, %25 : vector<1x128xi1>
    %c-1_i32_17 = arith.constant -1 : i32
    %27 = vector.broadcast %c-1_i32_17 : i32 to vector<1x128xi32>
    %28 = arith.addi %2, %27 : vector<1x128xi32>
    %c0_i32_18 = arith.constant 0 : i32
    %29 = vector.broadcast %c0_i32_18 : i32 to vector<1x128xi32>
    %30 = arith.cmpi sge, %28, %29 : vector<1x128xi32>
    %31 = arith.andi %26, %30 : vector<1x128xi1>
    %c-1_i32_19 = arith.constant -1 : i32
    %32 = vector.broadcast %c-1_i32_19 : i32 to vector<1x128xi32>
    %33 = arith.addi %2, %32 : vector<1x128xi32>
    %c8_i32_20 = arith.constant 8 : i32
    %34 = vector.broadcast %c8_i32_20 : i32 to vector<1x128xi32>
    %35 = arith.cmpi slt, %33, %34 : vector<1x128xi32>
    %36 = arith.andi %31, %35 : vector<1x128xi1>
    %cst_21 = arith.constant 0.000000e+00 : f32
    %37 = vector.shape_cast %36 : vector<1x128xi1> to vector<1x128xi1>
    %38 = vector.broadcast %37 : vector<1x128xi1> to vector<16x128xi1>
    %39 = vector.broadcast %cst_21 : f32 to vector<16x128xf32>
    %40 = arith.select %38, %17, %39 : vector<16x128xi1>, vector<16x128xf32>
    %41 = vector.extract_strided_slice %13 {offsets = [0, 0], sizes = [16, 1], strides = [1, 1]} : vector<16x9xf32> to vector<16x1xf32>
    %42 = vector.broadcast %41 : vector<16x1xf32> to vector<16x128xf32>
    %43 = arith.mulf %40, %42 : vector<16x128xf32>
    %44 = arith.addf %16, %43 : vector<16x128xf32>
    %c8_i32_22 = arith.constant 8 : i32
    %45 = tpu.dynamic_rotate %7 by %c8_i32_22 dim 1 : vector<16x128xf32>, i32 -> vector<16x128xf32>
    %c-1_i32_23 = arith.constant -1 : i32
    %46 = vector.broadcast %c-1_i32_23 : i32 to vector<1x128xi32>
    %47 = arith.addi %1, %46 : vector<1x128xi32>
    %c0_i32_24 = arith.constant 0 : i32
    %48 = vector.broadcast %c0_i32_24 : i32 to vector<1x128xi32>
    %49 = arith.cmpi sge, %47, %48 : vector<1x128xi32>
    %c-1_i32_25 = arith.constant -1 : i32
    %50 = vector.broadcast %c-1_i32_25 : i32 to vector<1x128xi32>
    %51 = arith.addi %1, %50 : vector<1x128xi32>
    %c8_i32_26 = arith.constant 8 : i32
    %52 = vector.broadcast %c8_i32_26 : i32 to vector<1x128xi32>
    %53 = arith.cmpi slt, %51, %52 : vector<1x128xi32>
    %54 = arith.andi %49, %53 : vector<1x128xi1>
    %c0_i32_27 = arith.constant 0 : i32
    %55 = vector.broadcast %c0_i32_27 : i32 to vector<1x128xi32>
    %56 = arith.addi %2, %55 : vector<1x128xi32>
    %c0_i32_28 = arith.constant 0 : i32
    %57 = vector.broadcast %c0_i32_28 : i32 to vector<1x128xi32>
    %58 = arith.cmpi sge, %56, %57 : vector<1x128xi32>
    %59 = arith.andi %54, %58 : vector<1x128xi1>
    %c0_i32_29 = arith.constant 0 : i32
    %60 = vector.broadcast %c0_i32_29 : i32 to vector<1x128xi32>
    %61 = arith.addi %2, %60 : vector<1x128xi32>
    %c8_i32_30 = arith.constant 8 : i32
    %62 = vector.broadcast %c8_i32_30 : i32 to vector<1x128xi32>
    %63 = arith.cmpi slt, %61, %62 : vector<1x128xi32>
    %64 = arith.andi %59, %63 : vector<1x128xi1>
    %cst_31 = arith.constant 0.000000e+00 : f32
    %65 = vector.shape_cast %64 : vector<1x128xi1> to vector<1x128xi1>
    %66 = vector.broadcast %65 : vector<1x128xi1> to vector<16x128xi1>
    %67 = vector.broadcast %cst_31 : f32 to vector<16x128xf32>
    %68 = arith.select %66, %45, %67 : vector<16x128xi1>, vector<16x128xf32>
    %69 = vector.extract_strided_slice %13 {offsets = [0, 1], sizes = [16, 1], strides = [1, 1]} : vector<16x9xf32> to vector<16x1xf32>
    %70 = vector.broadcast %69 : vector<16x1xf32> to vector<16x128xf32>
    %71 = arith.mulf %68, %70 : vector<16x128xf32>
    %72 = arith.addf %44, %71 : vector<16x128xf32>
    %c7_i32 = arith.constant 7 : i32
    %73 = tpu.dynamic_rotate %7 by %c7_i32 dim 1 : vector<16x128xf32>, i32 -> vector<16x128xf32>
    %c-1_i32_32 = arith.constant -1 : i32
    %74 = vector.broadcast %c-1_i32_32 : i32 to vector<1x128xi32>
    %75 = arith.addi %1, %74 : vector<1x128xi32>
    %c0_i32_33 = arith.constant 0 : i32
    %76 = vector.broadcast %c0_i32_33 : i32 to vector<1x128xi32>
    %77 = arith.cmpi sge, %75, %76 : vector<1x128xi32>
    %c-1_i32_34 = arith.constant -1 : i32
    %78 = vector.broadcast %c-1_i32_34 : i32 to vector<1x128xi32>
    %79 = arith.addi %1, %78 : vector<1x128xi32>
    %c8_i32_35 = arith.constant 8 : i32
    %80 = vector.broadcast %c8_i32_35 : i32 to vector<1x128xi32>
    %81 = arith.cmpi slt, %79, %80 : vector<1x128xi32>
    %82 = arith.andi %77, %81 : vector<1x128xi1>
    %c1_i32 = arith.constant 1 : i32
    %83 = vector.broadcast %c1_i32 : i32 to vector<1x128xi32>
    %84 = arith.addi %2, %83 : vector<1x128xi32>
    %c0_i32_36 = arith.constant 0 : i32
    %85 = vector.broadcast %c0_i32_36 : i32 to vector<1x128xi32>
    %86 = arith.cmpi sge, %84, %85 : vector<1x128xi32>
    %87 = arith.andi %82, %86 : vector<1x128xi1>
    %c1_i32_37 = arith.constant 1 : i32
    %88 = vector.broadcast %c1_i32_37 : i32 to vector<1x128xi32>
    %89 = arith.addi %2, %88 : vector<1x128xi32>
    %c8_i32_38 = arith.constant 8 : i32
    %90 = vector.broadcast %c8_i32_38 : i32 to vector<1x128xi32>
    %91 = arith.cmpi slt, %89, %90 : vector<1x128xi32>
    %92 = arith.andi %87, %91 : vector<1x128xi1>
    %cst_39 = arith.constant 0.000000e+00 : f32
    %93 = vector.shape_cast %92 : vector<1x128xi1> to vector<1x128xi1>
    %94 = vector.broadcast %93 : vector<1x128xi1> to vector<16x128xi1>
    %95 = vector.broadcast %cst_39 : f32 to vector<16x128xf32>
    %96 = arith.select %94, %73, %95 : vector<16x128xi1>, vector<16x128xf32>
    %97 = vector.extract_strided_slice %13 {offsets = [0, 2], sizes = [16, 1], strides = [1, 1]} : vector<16x9xf32> to vector<16x1xf32>
    %98 = vector.broadcast %97 : vector<16x1xf32> to vector<16x128xf32>
    %99 = arith.mulf %96, %98 : vector<16x128xf32>
    %100 = arith.addf %72, %99 : vector<16x128xf32>
    %c1_i32_40 = arith.constant 1 : i32
    %101 = tpu.dynamic_rotate %7 by %c1_i32_40 dim 1 : vector<16x128xf32>, i32 -> vector<16x128xf32>
    %c0_i32_41 = arith.constant 0 : i32
    %102 = vector.broadcast %c0_i32_41 : i32 to vector<1x128xi32>
    %103 = arith.addi %1, %102 : vector<1x128xi32>
    %c0_i32_42 = arith.constant 0 : i32
    %104 = vector.broadcast %c0_i32_42 : i32 to vector<1x128xi32>
    %105 = arith.cmpi sge, %103, %104 : vector<1x128xi32>
    %c0_i32_43 = arith.constant 0 : i32
    %106 = vector.broadcast %c0_i32_43 : i32 to vector<1x128xi32>
    %107 = arith.addi %1, %106 : vector<1x128xi32>
    %c8_i32_44 = arith.constant 8 : i32
    %108 = vector.broadcast %c8_i32_44 : i32 to vector<1x128xi32>
    %109 = arith.cmpi slt, %107, %108 : vector<1x128xi32>
    %110 = arith.andi %105, %109 : vector<1x128xi1>
    %c-1_i32_45 = arith.constant -1 : i32
    %111 = vector.broadcast %c-1_i32_45 : i32 to vector<1x128xi32>
    %112 = arith.addi %2, %111 : vector<1x128xi32>
    %c0_i32_46 = arith.constant 0 : i32
    %113 = vector.broadcast %c0_i32_46 : i32 to vector<1x128xi32>
    %114 = arith.cmpi sge, %112, %113 : vector<1x128xi32>
    %115 = arith.andi %110, %114 : vector<1x128xi1>
    %c-1_i32_47 = arith.constant -1 : i32
    %116 = vector.broadcast %c-1_i32_47 : i32 to vector<1x128xi32>
    %117 = arith.addi %2, %116 : vector<1x128xi32>
    %c8_i32_48 = arith.constant 8 : i32
    %118 = vector.broadcast %c8_i32_48 : i32 to vector<1x128xi32>
    %119 = arith.cmpi slt, %117, %118 : vector<1x128xi32>
    %120 = arith.andi %115, %119 : vector<1x128xi1>
    %cst_49 = arith.constant 0.000000e+00 : f32
    %121 = vector.shape_cast %120 : vector<1x128xi1> to vector<1x128xi1>
    %122 = vector.broadcast %121 : vector<1x128xi1> to vector<16x128xi1>
    %123 = vector.broadcast %cst_49 : f32 to vector<16x128xf32>
    %124 = arith.select %122, %101, %123 : vector<16x128xi1>, vector<16x128xf32>
    %125 = vector.extract_strided_slice %13 {offsets = [0, 3], sizes = [16, 1], strides = [1, 1]} : vector<16x9xf32> to vector<16x1xf32>
    %126 = vector.broadcast %125 : vector<16x1xf32> to vector<16x128xf32>
    %127 = arith.mulf %124, %126 : vector<16x128xf32>
    %128 = arith.addf %100, %127 : vector<16x128xf32>
    %c127_i32 = arith.constant 127 : i32
    %129 = tpu.dynamic_rotate %7 by %c127_i32 dim 1 : vector<16x128xf32>, i32 -> vector<16x128xf32>
    %c0_i32_50 = arith.constant 0 : i32
    %130 = vector.broadcast %c0_i32_50 : i32 to vector<1x128xi32>
    %131 = arith.addi %1, %130 : vector<1x128xi32>
    %c0_i32_51 = arith.constant 0 : i32
    %132 = vector.broadcast %c0_i32_51 : i32 to vector<1x128xi32>
    %133 = arith.cmpi sge, %131, %132 : vector<1x128xi32>
    %c0_i32_52 = arith.constant 0 : i32
    %134 = vector.broadcast %c0_i32_52 : i32 to vector<1x128xi32>
    %135 = arith.addi %1, %134 : vector<1x128xi32>
    %c8_i32_53 = arith.constant 8 : i32
    %136 = vector.broadcast %c8_i32_53 : i32 to vector<1x128xi32>
    %137 = arith.cmpi slt, %135, %136 : vector<1x128xi32>
    %138 = arith.andi %133, %137 : vector<1x128xi1>
    %c1_i32_54 = arith.constant 1 : i32
    %139 = vector.broadcast %c1_i32_54 : i32 to vector<1x128xi32>
    %140 = arith.addi %2, %139 : vector<1x128xi32>
    %c0_i32_55 = arith.constant 0 : i32
    %141 = vector.broadcast %c0_i32_55 : i32 to vector<1x128xi32>
    %142 = arith.cmpi sge, %140, %141 : vector<1x128xi32>
    %143 = arith.andi %138, %142 : vector<1x128xi1>
    %c1_i32_56 = arith.constant 1 : i32
    %144 = vector.broadcast %c1_i32_56 : i32 to vector<1x128xi32>
    %145 = arith.addi %2, %144 : vector<1x128xi32>
    %c8_i32_57 = arith.constant 8 : i32
    %146 = vector.broadcast %c8_i32_57 : i32 to vector<1x128xi32>
    %147 = arith.cmpi slt, %145, %146 : vector<1x128xi32>
    %148 = arith.andi %143, %147 : vector<1x128xi1>
    %cst_58 = arith.constant 0.000000e+00 : f32
    %149 = vector.shape_cast %148 : vector<1x128xi1> to vector<1x128xi1>
    %150 = vector.broadcast %149 : vector<1x128xi1> to vector<16x128xi1>
    %151 = vector.broadcast %cst_58 : f32 to vector<16x128xf32>
    %152 = arith.select %150, %129, %151 : vector<16x128xi1>, vector<16x128xf32>
    %153 = vector.extract_strided_slice %13 {offsets = [0, 5], sizes = [16, 1], strides = [1, 1]} : vector<16x9xf32> to vector<16x1xf32>
    %154 = vector.broadcast %153 : vector<16x1xf32> to vector<16x128xf32>
    %155 = arith.mulf %152, %154 : vector<16x128xf32>
    %156 = arith.addf %128, %155 : vector<16x128xf32>
    %c121_i32 = arith.constant 121 : i32
    %157 = tpu.dynamic_rotate %7 by %c121_i32 dim 1 : vector<16x128xf32>, i32 -> vector<16x128xf32>
    %c1_i32_59 = arith.constant 1 : i32
    %158 = vector.broadcast %c1_i32_59 : i32 to vector<1x128xi32>
    %159 = arith.addi %1, %158 : vector<1x128xi32>
    %c0_i32_60 = arith.constant 0 : i32
    %160 = vector.broadcast %c0_i32_60 : i32 to vector<1x128xi32>
    %161 = arith.cmpi sge, %159, %160 : vector<1x128xi32>
    %c1_i32_61 = arith.constant 1 : i32
    %162 = vector.broadcast %c1_i32_61 : i32 to vector<1x128xi32>
    %163 = arith.addi %1, %162 : vector<1x128xi32>
    %c8_i32_62 = arith.constant 8 : i32
    %164 = vector.broadcast %c8_i32_62 : i32 to vector<1x128xi32>
    %165 = arith.cmpi slt, %163, %164 : vector<1x128xi32>
    %166 = arith.andi %161, %165 : vector<1x128xi1>
    %c-1_i32_63 = arith.constant -1 : i32
    %167 = vector.broadcast %c-1_i32_63 : i32 to vector<1x128xi32>
    %168 = arith.addi %2, %167 : vector<1x128xi32>
    %c0_i32_64 = arith.constant 0 : i32
    %169 = vector.broadcast %c0_i32_64 : i32 to vector<1x128xi32>
    %170 = arith.cmpi sge, %168, %169 : vector<1x128xi32>
    %171 = arith.andi %166, %170 : vector<1x128xi1>
    %c-1_i32_65 = arith.constant -1 : i32
    %172 = vector.broadcast %c-1_i32_65 : i32 to vector<1x128xi32>
    %173 = arith.addi %2, %172 : vector<1x128xi32>
    %c8_i32_66 = arith.constant 8 : i32
    %174 = vector.broadcast %c8_i32_66 : i32 to vector<1x128xi32>
    %175 = arith.cmpi slt, %173, %174 : vector<1x128xi32>
    %176 = arith.andi %171, %175 : vector<1x128xi1>
    %cst_67 = arith.constant 0.000000e+00 : f32
    %177 = vector.shape_cast %176 : vector<1x128xi1> to vector<1x128xi1>
    %178 = vector.broadcast %177 : vector<1x128xi1> to vector<16x128xi1>
    %179 = vector.broadcast %cst_67 : f32 to vector<16x128xf32>
    %180 = arith.select %178, %157, %179 : vector<16x128xi1>, vector<16x128xf32>
    %181 = vector.extract_strided_slice %13 {offsets = [0, 6], sizes = [16, 1], strides = [1, 1]} : vector<16x9xf32> to vector<16x1xf32>
    %182 = vector.broadcast %181 : vector<16x1xf32> to vector<16x128xf32>
    %183 = arith.mulf %180, %182 : vector<16x128xf32>
    %184 = arith.addf %156, %183 : vector<16x128xf32>
    %c120_i32 = arith.constant 120 : i32
    %185 = tpu.dynamic_rotate %7 by %c120_i32 dim 1 : vector<16x128xf32>, i32 -> vector<16x128xf32>
    %c1_i32_68 = arith.constant 1 : i32
    %186 = vector.broadcast %c1_i32_68 : i32 to vector<1x128xi32>
    %187 = arith.addi %1, %186 : vector<1x128xi32>
    %c0_i32_69 = arith.constant 0 : i32
    %188 = vector.broadcast %c0_i32_69 : i32 to vector<1x128xi32>
    %189 = arith.cmpi sge, %187, %188 : vector<1x128xi32>
    %c1_i32_70 = arith.constant 1 : i32
    %190 = vector.broadcast %c1_i32_70 : i32 to vector<1x128xi32>
    %191 = arith.addi %1, %190 : vector<1x128xi32>
    %c8_i32_71 = arith.constant 8 : i32
    %192 = vector.broadcast %c8_i32_71 : i32 to vector<1x128xi32>
    %193 = arith.cmpi slt, %191, %192 : vector<1x128xi32>
    %194 = arith.andi %189, %193 : vector<1x128xi1>
    %c0_i32_72 = arith.constant 0 : i32
    %195 = vector.broadcast %c0_i32_72 : i32 to vector<1x128xi32>
    %196 = arith.addi %2, %195 : vector<1x128xi32>
    %c0_i32_73 = arith.constant 0 : i32
    %197 = vector.broadcast %c0_i32_73 : i32 to vector<1x128xi32>
    %198 = arith.cmpi sge, %196, %197 : vector<1x128xi32>
    %199 = arith.andi %194, %198 : vector<1x128xi1>
    %c0_i32_74 = arith.constant 0 : i32
    %200 = vector.broadcast %c0_i32_74 : i32 to vector<1x128xi32>
    %201 = arith.addi %2, %200 : vector<1x128xi32>
    %c8_i32_75 = arith.constant 8 : i32
    %202 = vector.broadcast %c8_i32_75 : i32 to vector<1x128xi32>
    %203 = arith.cmpi slt, %201, %202 : vector<1x128xi32>
    %204 = arith.andi %199, %203 : vector<1x128xi1>
    %cst_76 = arith.constant 0.000000e+00 : f32
    %205 = vector.shape_cast %204 : vector<1x128xi1> to vector<1x128xi1>
    %206 = vector.broadcast %205 : vector<1x128xi1> to vector<16x128xi1>
    %207 = vector.broadcast %cst_76 : f32 to vector<16x128xf32>
    %208 = arith.select %206, %185, %207 : vector<16x128xi1>, vector<16x128xf32>
    %209 = vector.extract_strided_slice %13 {offsets = [0, 7], sizes = [16, 1], strides = [1, 1]} : vector<16x9xf32> to vector<16x1xf32>
    %210 = vector.broadcast %209 : vector<16x1xf32> to vector<16x128xf32>
    %211 = arith.mulf %208, %210 : vector<16x128xf32>
    %212 = arith.addf %184, %211 : vector<16x128xf32>
    %c119_i32 = arith.constant 119 : i32
    %213 = tpu.dynamic_rotate %7 by %c119_i32 dim 1 : vector<16x128xf32>, i32 -> vector<16x128xf32>
    %c1_i32_77 = arith.constant 1 : i32
    %214 = vector.broadcast %c1_i32_77 : i32 to vector<1x128xi32>
    %215 = arith.addi %1, %214 : vector<1x128xi32>
    %c0_i32_78 = arith.constant 0 : i32
    %216 = vector.broadcast %c0_i32_78 : i32 to vector<1x128xi32>
    %217 = arith.cmpi sge, %215, %216 : vector<1x128xi32>
    %c1_i32_79 = arith.constant 1 : i32
    %218 = vector.broadcast %c1_i32_79 : i32 to vector<1x128xi32>
    %219 = arith.addi %1, %218 : vector<1x128xi32>
    %c8_i32_80 = arith.constant 8 : i32
    %220 = vector.broadcast %c8_i32_80 : i32 to vector<1x128xi32>
    %221 = arith.cmpi slt, %219, %220 : vector<1x128xi32>
    %222 = arith.andi %217, %221 : vector<1x128xi1>
    %c1_i32_81 = arith.constant 1 : i32
    %223 = vector.broadcast %c1_i32_81 : i32 to vector<1x128xi32>
    %224 = arith.addi %2, %223 : vector<1x128xi32>
    %c0_i32_82 = arith.constant 0 : i32
    %225 = vector.broadcast %c0_i32_82 : i32 to vector<1x128xi32>
    %226 = arith.cmpi sge, %224, %225 : vector<1x128xi32>
    %227 = arith.andi %222, %226 : vector<1x128xi1>
    %c1_i32_83 = arith.constant 1 : i32
    %228 = vector.broadcast %c1_i32_83 : i32 to vector<1x128xi32>
    %229 = arith.addi %2, %228 : vector<1x128xi32>
    %c8_i32_84 = arith.constant 8 : i32
    %230 = vector.broadcast %c8_i32_84 : i32 to vector<1x128xi32>
    %231 = arith.cmpi slt, %229, %230 : vector<1x128xi32>
    %232 = arith.andi %227, %231 : vector<1x128xi1>
    %cst_85 = arith.constant 0.000000e+00 : f32
    %233 = vector.shape_cast %232 : vector<1x128xi1> to vector<1x128xi1>
    %234 = vector.broadcast %233 : vector<1x128xi1> to vector<16x128xi1>
    %235 = vector.broadcast %cst_85 : f32 to vector<16x128xf32>
    %236 = arith.select %234, %213, %235 : vector<16x128xi1>, vector<16x128xf32>
    %237 = vector.extract_strided_slice %13 {offsets = [0, 8], sizes = [16, 1], strides = [1, 1]} : vector<16x9xf32> to vector<16x1xf32>
    %238 = vector.broadcast %237 : vector<16x1xf32> to vector<16x128xf32>
    %239 = arith.mulf %236, %238 : vector<16x128xf32>
    %240 = arith.addf %212, %239 : vector<16x128xf32>
    %c0_86 = arith.constant 0 : index
    %c0_87 = arith.constant 0 : index
    %241 = vector.load %arg10[%c0_86, %c0_87] : memref<16x1xf32, #tpu.memory_space<vmem>>, vector<16x1xf32>
    %242 = vector.broadcast %241 : vector<16x1xf32> to vector<16x128xf32>
    %243 = arith.addf %240, %242 : vector<16x128xf32>
    %c0_88 = arith.constant 0 : index
    %c0_89 = arith.constant 0 : index
    %244 = vector.load %arg9[%c0_88, %c0_89] : memref<16x9xf32, #tpu.memory_space<vmem>>, vector<16x9xf32>
    %245 = vector.extract_strided_slice %244 {offsets = [0, 4], sizes = [16, 1], strides = [1, 1]} : vector<16x9xf32> to vector<16x1xf32>
    %246 = vector.broadcast %245 : vector<16x1xf32> to vector<16x128xf32>
    %247 = arith.mulf %12, %246 : vector<16x128xf32>
    %c9_i32_90 = arith.constant 9 : i32
    %248 = tpu.dynamic_rotate %12 by %c9_i32_90 dim 1 : vector<16x128xf32>, i32 -> vector<16x128xf32>
    %c-1_i32_91 = arith.constant -1 : i32
    %249 = vector.broadcast %c-1_i32_91 : i32 to vector<1x128xi32>
    %250 = arith.addi %1, %249 : vector<1x128xi32>
    %c0_i32_92 = arith.constant 0 : i32
    %251 = vector.broadcast %c0_i32_92 : i32 to vector<1x128xi32>
    %252 = arith.cmpi sge, %250, %251 : vector<1x128xi32>
    %c-1_i32_93 = arith.constant -1 : i32
    %253 = vector.broadcast %c-1_i32_93 : i32 to vector<1x128xi32>
    %254 = arith.addi %1, %253 : vector<1x128xi32>
    %c8_i32_94 = arith.constant 8 : i32
    %255 = vector.broadcast %c8_i32_94 : i32 to vector<1x128xi32>
    %256 = arith.cmpi slt, %254, %255 : vector<1x128xi32>
    %257 = arith.andi %252, %256 : vector<1x128xi1>
    %c-1_i32_95 = arith.constant -1 : i32
    %258 = vector.broadcast %c-1_i32_95 : i32 to vector<1x128xi32>
    %259 = arith.addi %2, %258 : vector<1x128xi32>
    %c0_i32_96 = arith.constant 0 : i32
    %260 = vector.broadcast %c0_i32_96 : i32 to vector<1x128xi32>
    %261 = arith.cmpi sge, %259, %260 : vector<1x128xi32>
    %262 = arith.andi %257, %261 : vector<1x128xi1>
    %c-1_i32_97 = arith.constant -1 : i32
    %263 = vector.broadcast %c-1_i32_97 : i32 to vector<1x128xi32>
    %264 = arith.addi %2, %263 : vector<1x128xi32>
    %c8_i32_98 = arith.constant 8 : i32
    %265 = vector.broadcast %c8_i32_98 : i32 to vector<1x128xi32>
    %266 = arith.cmpi slt, %264, %265 : vector<1x128xi32>
    %267 = arith.andi %262, %266 : vector<1x128xi1>
    %cst_99 = arith.constant 0.000000e+00 : f32
    %268 = vector.shape_cast %267 : vector<1x128xi1> to vector<1x128xi1>
    %269 = vector.broadcast %268 : vector<1x128xi1> to vector<16x128xi1>
    %270 = vector.broadcast %cst_99 : f32 to vector<16x128xf32>
    %271 = arith.select %269, %248, %270 : vector<16x128xi1>, vector<16x128xf32>
    %272 = vector.extract_strided_slice %244 {offsets = [0, 0], sizes = [16, 1], strides = [1, 1]} : vector<16x9xf32> to vector<16x1xf32>
    %273 = vector.broadcast %272 : vector<16x1xf32> to vector<16x128xf32>
    %274 = arith.mulf %271, %273 : vector<16x128xf32>
    %275 = arith.addf %247, %274 : vector<16x128xf32>
    %c8_i32_100 = arith.constant 8 : i32
    %276 = tpu.dynamic_rotate %12 by %c8_i32_100 dim 1 : vector<16x128xf32>, i32 -> vector<16x128xf32>
    %c-1_i32_101 = arith.constant -1 : i32
    %277 = vector.broadcast %c-1_i32_101 : i32 to vector<1x128xi32>
    %278 = arith.addi %1, %277 : vector<1x128xi32>
    %c0_i32_102 = arith.constant 0 : i32
    %279 = vector.broadcast %c0_i32_102 : i32 to vector<1x128xi32>
    %280 = arith.cmpi sge, %278, %279 : vector<1x128xi32>
    %c-1_i32_103 = arith.constant -1 : i32
    %281 = vector.broadcast %c-1_i32_103 : i32 to vector<1x128xi32>
    %282 = arith.addi %1, %281 : vector<1x128xi32>
    %c8_i32_104 = arith.constant 8 : i32
    %283 = vector.broadcast %c8_i32_104 : i32 to vector<1x128xi32>
    %284 = arith.cmpi slt, %282, %283 : vector<1x128xi32>
    %285 = arith.andi %280, %284 : vector<1x128xi1>
    %c0_i32_105 = arith.constant 0 : i32
    %286 = vector.broadcast %c0_i32_105 : i32 to vector<1x128xi32>
    %287 = arith.addi %2, %286 : vector<1x128xi32>
    %c0_i32_106 = arith.constant 0 : i32
    %288 = vector.broadcast %c0_i32_106 : i32 to vector<1x128xi32>
    %289 = arith.cmpi sge, %287, %288 : vector<1x128xi32>
    %290 = arith.andi %285, %289 : vector<1x128xi1>
    %c0_i32_107 = arith.constant 0 : i32
    %291 = vector.broadcast %c0_i32_107 : i32 to vector<1x128xi32>
    %292 = arith.addi %2, %291 : vector<1x128xi32>
    %c8_i32_108 = arith.constant 8 : i32
    %293 = vector.broadcast %c8_i32_108 : i32 to vector<1x128xi32>
    %294 = arith.cmpi slt, %292, %293 : vector<1x128xi32>
    %295 = arith.andi %290, %294 : vector<1x128xi1>
    %cst_109 = arith.constant 0.000000e+00 : f32
    %296 = vector.shape_cast %295 : vector<1x128xi1> to vector<1x128xi1>
    %297 = vector.broadcast %296 : vector<1x128xi1> to vector<16x128xi1>
    %298 = vector.broadcast %cst_109 : f32 to vector<16x128xf32>
    %299 = arith.select %297, %276, %298 : vector<16x128xi1>, vector<16x128xf32>
    %300 = vector.extract_strided_slice %244 {offsets = [0, 1], sizes = [16, 1], strides = [1, 1]} : vector<16x9xf32> to vector<16x1xf32>
    %301 = vector.broadcast %300 : vector<16x1xf32> to vector<16x128xf32>
    %302 = arith.mulf %299, %301 : vector<16x128xf32>
    %303 = arith.addf %275, %302 : vector<16x128xf32>
    %c7_i32_110 = arith.constant 7 : i32
    %304 = tpu.dynamic_rotate %12 by %c7_i32_110 dim 1 : vector<16x128xf32>, i32 -> vector<16x128xf32>
    %c-1_i32_111 = arith.constant -1 : i32
    %305 = vector.broadcast %c-1_i32_111 : i32 to vector<1x128xi32>
    %306 = arith.addi %1, %305 : vector<1x128xi32>
    %c0_i32_112 = arith.constant 0 : i32
    %307 = vector.broadcast %c0_i32_112 : i32 to vector<1x128xi32>
    %308 = arith.cmpi sge, %306, %307 : vector<1x128xi32>
    %c-1_i32_113 = arith.constant -1 : i32
    %309 = vector.broadcast %c-1_i32_113 : i32 to vector<1x128xi32>
    %310 = arith.addi %1, %309 : vector<1x128xi32>
    %c8_i32_114 = arith.constant 8 : i32
    %311 = vector.broadcast %c8_i32_114 : i32 to vector<1x128xi32>
    %312 = arith.cmpi slt, %310, %311 : vector<1x128xi32>
    %313 = arith.andi %308, %312 : vector<1x128xi1>
    %c1_i32_115 = arith.constant 1 : i32
    %314 = vector.broadcast %c1_i32_115 : i32 to vector<1x128xi32>
    %315 = arith.addi %2, %314 : vector<1x128xi32>
    %c0_i32_116 = arith.constant 0 : i32
    %316 = vector.broadcast %c0_i32_116 : i32 to vector<1x128xi32>
    %317 = arith.cmpi sge, %315, %316 : vector<1x128xi32>
    %318 = arith.andi %313, %317 : vector<1x128xi1>
    %c1_i32_117 = arith.constant 1 : i32
    %319 = vector.broadcast %c1_i32_117 : i32 to vector<1x128xi32>
    %320 = arith.addi %2, %319 : vector<1x128xi32>
    %c8_i32_118 = arith.constant 8 : i32
    %321 = vector.broadcast %c8_i32_118 : i32 to vector<1x128xi32>
    %322 = arith.cmpi slt, %320, %321 : vector<1x128xi32>
    %323 = arith.andi %318, %322 : vector<1x128xi1>
    %cst_119 = arith.constant 0.000000e+00 : f32
    %324 = vector.shape_cast %323 : vector<1x128xi1> to vector<1x128xi1>
    %325 = vector.broadcast %324 : vector<1x128xi1> to vector<16x128xi1>
    %326 = vector.broadcast %cst_119 : f32 to vector<16x128xf32>
    %327 = arith.select %325, %304, %326 : vector<16x128xi1>, vector<16x128xf32>
    %328 = vector.extract_strided_slice %244 {offsets = [0, 2], sizes = [16, 1], strides = [1, 1]} : vector<16x9xf32> to vector<16x1xf32>
    %329 = vector.broadcast %328 : vector<16x1xf32> to vector<16x128xf32>
    %330 = arith.mulf %327, %329 : vector<16x128xf32>
    %331 = arith.addf %303, %330 : vector<16x128xf32>
    %c1_i32_120 = arith.constant 1 : i32
    %332 = tpu.dynamic_rotate %12 by %c1_i32_120 dim 1 : vector<16x128xf32>, i32 -> vector<16x128xf32>
    %c0_i32_121 = arith.constant 0 : i32
    %333 = vector.broadcast %c0_i32_121 : i32 to vector<1x128xi32>
    %334 = arith.addi %1, %333 : vector<1x128xi32>
    %c0_i32_122 = arith.constant 0 : i32
    %335 = vector.broadcast %c0_i32_122 : i32 to vector<1x128xi32>
    %336 = arith.cmpi sge, %334, %335 : vector<1x128xi32>
    %c0_i32_123 = arith.constant 0 : i32
    %337 = vector.broadcast %c0_i32_123 : i32 to vector<1x128xi32>
    %338 = arith.addi %1, %337 : vector<1x128xi32>
    %c8_i32_124 = arith.constant 8 : i32
    %339 = vector.broadcast %c8_i32_124 : i32 to vector<1x128xi32>
    %340 = arith.cmpi slt, %338, %339 : vector<1x128xi32>
    %341 = arith.andi %336, %340 : vector<1x128xi1>
    %c-1_i32_125 = arith.constant -1 : i32
    %342 = vector.broadcast %c-1_i32_125 : i32 to vector<1x128xi32>
    %343 = arith.addi %2, %342 : vector<1x128xi32>
    %c0_i32_126 = arith.constant 0 : i32
    %344 = vector.broadcast %c0_i32_126 : i32 to vector<1x128xi32>
    %345 = arith.cmpi sge, %343, %344 : vector<1x128xi32>
    %346 = arith.andi %341, %345 : vector<1x128xi1>
    %c-1_i32_127 = arith.constant -1 : i32
    %347 = vector.broadcast %c-1_i32_127 : i32 to vector<1x128xi32>
    %348 = arith.addi %2, %347 : vector<1x128xi32>
    %c8_i32_128 = arith.constant 8 : i32
    %349 = vector.broadcast %c8_i32_128 : i32 to vector<1x128xi32>
    %350 = arith.cmpi slt, %348, %349 : vector<1x128xi32>
    %351 = arith.andi %346, %350 : vector<1x128xi1>
    %cst_129 = arith.constant 0.000000e+00 : f32
    %352 = vector.shape_cast %351 : vector<1x128xi1> to vector<1x128xi1>
    %353 = vector.broadcast %352 : vector<1x128xi1> to vector<16x128xi1>
    %354 = vector.broadcast %cst_129 : f32 to vector<16x128xf32>
    %355 = arith.select %353, %332, %354 : vector<16x128xi1>, vector<16x128xf32>
    %356 = vector.extract_strided_slice %244 {offsets = [0, 3], sizes = [16, 1], strides = [1, 1]} : vector<16x9xf32> to vector<16x1xf32>
    %357 = vector.broadcast %356 : vector<16x1xf32> to vector<16x128xf32>
    %358 = arith.mulf %355, %357 : vector<16x128xf32>
    %359 = arith.addf %331, %358 : vector<16x128xf32>
    %c127_i32_130 = arith.constant 127 : i32
    %360 = tpu.dynamic_rotate %12 by %c127_i32_130 dim 1 : vector<16x128xf32>, i32 -> vector<16x128xf32>
    %c0_i32_131 = arith.constant 0 : i32
    %361 = vector.broadcast %c0_i32_131 : i32 to vector<1x128xi32>
    %362 = arith.addi %1, %361 : vector<1x128xi32>
    %c0_i32_132 = arith.constant 0 : i32
    %363 = vector.broadcast %c0_i32_132 : i32 to vector<1x128xi32>
    %364 = arith.cmpi sge, %362, %363 : vector<1x128xi32>
    %c0_i32_133 = arith.constant 0 : i32
    %365 = vector.broadcast %c0_i32_133 : i32 to vector<1x128xi32>
    %366 = arith.addi %1, %365 : vector<1x128xi32>
    %c8_i32_134 = arith.constant 8 : i32
    %367 = vector.broadcast %c8_i32_134 : i32 to vector<1x128xi32>
    %368 = arith.cmpi slt, %366, %367 : vector<1x128xi32>
    %369 = arith.andi %364, %368 : vector<1x128xi1>
    %c1_i32_135 = arith.constant 1 : i32
    %370 = vector.broadcast %c1_i32_135 : i32 to vector<1x128xi32>
    %371 = arith.addi %2, %370 : vector<1x128xi32>
    %c0_i32_136 = arith.constant 0 : i32
    %372 = vector.broadcast %c0_i32_136 : i32 to vector<1x128xi32>
    %373 = arith.cmpi sge, %371, %372 : vector<1x128xi32>
    %374 = arith.andi %369, %373 : vector<1x128xi1>
    %c1_i32_137 = arith.constant 1 : i32
    %375 = vector.broadcast %c1_i32_137 : i32 to vector<1x128xi32>
    %376 = arith.addi %2, %375 : vector<1x128xi32>
    %c8_i32_138 = arith.constant 8 : i32
    %377 = vector.broadcast %c8_i32_138 : i32 to vector<1x128xi32>
    %378 = arith.cmpi slt, %376, %377 : vector<1x128xi32>
    %379 = arith.andi %374, %378 : vector<1x128xi1>
    %cst_139 = arith.constant 0.000000e+00 : f32
    %380 = vector.shape_cast %379 : vector<1x128xi1> to vector<1x128xi1>
    %381 = vector.broadcast %380 : vector<1x128xi1> to vector<16x128xi1>
    %382 = vector.broadcast %cst_139 : f32 to vector<16x128xf32>
    %383 = arith.select %381, %360, %382 : vector<16x128xi1>, vector<16x128xf32>
    %384 = vector.extract_strided_slice %244 {offsets = [0, 5], sizes = [16, 1], strides = [1, 1]} : vector<16x9xf32> to vector<16x1xf32>
    %385 = vector.broadcast %384 : vector<16x1xf32> to vector<16x128xf32>
    %386 = arith.mulf %383, %385 : vector<16x128xf32>
    %387 = arith.addf %359, %386 : vector<16x128xf32>
    %c121_i32_140 = arith.constant 121 : i32
    %388 = tpu.dynamic_rotate %12 by %c121_i32_140 dim 1 : vector<16x128xf32>, i32 -> vector<16x128xf32>
    %c1_i32_141 = arith.constant 1 : i32
    %389 = vector.broadcast %c1_i32_141 : i32 to vector<1x128xi32>
    %390 = arith.addi %1, %389 : vector<1x128xi32>
    %c0_i32_142 = arith.constant 0 : i32
    %391 = vector.broadcast %c0_i32_142 : i32 to vector<1x128xi32>
    %392 = arith.cmpi sge, %390, %391 : vector<1x128xi32>
    %c1_i32_143 = arith.constant 1 : i32
    %393 = vector.broadcast %c1_i32_143 : i32 to vector<1x128xi32>
    %394 = arith.addi %1, %393 : vector<1x128xi32>
    %c8_i32_144 = arith.constant 8 : i32
    %395 = vector.broadcast %c8_i32_144 : i32 to vector<1x128xi32>
    %396 = arith.cmpi slt, %394, %395 : vector<1x128xi32>
    %397 = arith.andi %392, %396 : vector<1x128xi1>
    %c-1_i32_145 = arith.constant -1 : i32
    %398 = vector.broadcast %c-1_i32_145 : i32 to vector<1x128xi32>
    %399 = arith.addi %2, %398 : vector<1x128xi32>
    %c0_i32_146 = arith.constant 0 : i32
    %400 = vector.broadcast %c0_i32_146 : i32 to vector<1x128xi32>
    %401 = arith.cmpi sge, %399, %400 : vector<1x128xi32>
    %402 = arith.andi %397, %401 : vector<1x128xi1>
    %c-1_i32_147 = arith.constant -1 : i32
    %403 = vector.broadcast %c-1_i32_147 : i32 to vector<1x128xi32>
    %404 = arith.addi %2, %403 : vector<1x128xi32>
    %c8_i32_148 = arith.constant 8 : i32
    %405 = vector.broadcast %c8_i32_148 : i32 to vector<1x128xi32>
    %406 = arith.cmpi slt, %404, %405 : vector<1x128xi32>
    %407 = arith.andi %402, %406 : vector<1x128xi1>
    %cst_149 = arith.constant 0.000000e+00 : f32
    %408 = vector.shape_cast %407 : vector<1x128xi1> to vector<1x128xi1>
    %409 = vector.broadcast %408 : vector<1x128xi1> to vector<16x128xi1>
    %410 = vector.broadcast %cst_149 : f32 to vector<16x128xf32>
    %411 = arith.select %409, %388, %410 : vector<16x128xi1>, vector<16x128xf32>
    %412 = vector.extract_strided_slice %244 {offsets = [0, 6], sizes = [16, 1], strides = [1, 1]} : vector<16x9xf32> to vector<16x1xf32>
    %413 = vector.broadcast %412 : vector<16x1xf32> to vector<16x128xf32>
    %414 = arith.mulf %411, %413 : vector<16x128xf32>
    %415 = arith.addf %387, %414 : vector<16x128xf32>
    %c120_i32_150 = arith.constant 120 : i32
    %416 = tpu.dynamic_rotate %12 by %c120_i32_150 dim 1 : vector<16x128xf32>, i32 -> vector<16x128xf32>
    %c1_i32_151 = arith.constant 1 : i32
    %417 = vector.broadcast %c1_i32_151 : i32 to vector<1x128xi32>
    %418 = arith.addi %1, %417 : vector<1x128xi32>
    %c0_i32_152 = arith.constant 0 : i32
    %419 = vector.broadcast %c0_i32_152 : i32 to vector<1x128xi32>
    %420 = arith.cmpi sge, %418, %419 : vector<1x128xi32>
    %c1_i32_153 = arith.constant 1 : i32
    %421 = vector.broadcast %c1_i32_153 : i32 to vector<1x128xi32>
    %422 = arith.addi %1, %421 : vector<1x128xi32>
    %c8_i32_154 = arith.constant 8 : i32
    %423 = vector.broadcast %c8_i32_154 : i32 to vector<1x128xi32>
    %424 = arith.cmpi slt, %422, %423 : vector<1x128xi32>
    %425 = arith.andi %420, %424 : vector<1x128xi1>
    %c0_i32_155 = arith.constant 0 : i32
    %426 = vector.broadcast %c0_i32_155 : i32 to vector<1x128xi32>
    %427 = arith.addi %2, %426 : vector<1x128xi32>
    %c0_i32_156 = arith.constant 0 : i32
    %428 = vector.broadcast %c0_i32_156 : i32 to vector<1x128xi32>
    %429 = arith.cmpi sge, %427, %428 : vector<1x128xi32>
    %430 = arith.andi %425, %429 : vector<1x128xi1>
    %c0_i32_157 = arith.constant 0 : i32
    %431 = vector.broadcast %c0_i32_157 : i32 to vector<1x128xi32>
    %432 = arith.addi %2, %431 : vector<1x128xi32>
    %c8_i32_158 = arith.constant 8 : i32
    %433 = vector.broadcast %c8_i32_158 : i32 to vector<1x128xi32>
    %434 = arith.cmpi slt, %432, %433 : vector<1x128xi32>
    %435 = arith.andi %430, %434 : vector<1x128xi1>
    %cst_159 = arith.constant 0.000000e+00 : f32
    %436 = vector.shape_cast %435 : vector<1x128xi1> to vector<1x128xi1>
    %437 = vector.broadcast %436 : vector<1x128xi1> to vector<16x128xi1>
    %438 = vector.broadcast %cst_159 : f32 to vector<16x128xf32>
    %439 = arith.select %437, %416, %438 : vector<16x128xi1>, vector<16x128xf32>
    %440 = vector.extract_strided_slice %244 {offsets = [0, 7], sizes = [16, 1], strides = [1, 1]} : vector<16x9xf32> to vector<16x1xf32>
    %441 = vector.broadcast %440 : vector<16x1xf32> to vector<16x128xf32>
    %442 = arith.mulf %439, %441 : vector<16x128xf32>
    %443 = arith.addf %415, %442 : vector<16x128xf32>
    %c119_i32_160 = arith.constant 119 : i32
    %444 = tpu.dynamic_rotate %12 by %c119_i32_160 dim 1 : vector<16x128xf32>, i32 -> vector<16x128xf32>
    %c1_i32_161 = arith.constant 1 : i32
    %445 = vector.broadcast %c1_i32_161 : i32 to vector<1x128xi32>
    %446 = arith.addi %1, %445 : vector<1x128xi32>
    %c0_i32_162 = arith.constant 0 : i32
    %447 = vector.broadcast %c0_i32_162 : i32 to vector<1x128xi32>
    %448 = arith.cmpi sge, %446, %447 : vector<1x128xi32>
    %c1_i32_163 = arith.constant 1 : i32
    %449 = vector.broadcast %c1_i32_163 : i32 to vector<1x128xi32>
    %450 = arith.addi %1, %449 : vector<1x128xi32>
    %c8_i32_164 = arith.constant 8 : i32
    %451 = vector.broadcast %c8_i32_164 : i32 to vector<1x128xi32>
    %452 = arith.cmpi slt, %450, %451 : vector<1x128xi32>
    %453 = arith.andi %448, %452 : vector<1x128xi1>
    %c1_i32_165 = arith.constant 1 : i32
    %454 = vector.broadcast %c1_i32_165 : i32 to vector<1x128xi32>
    %455 = arith.addi %2, %454 : vector<1x128xi32>
    %c0_i32_166 = arith.constant 0 : i32
    %456 = vector.broadcast %c0_i32_166 : i32 to vector<1x128xi32>
    %457 = arith.cmpi sge, %455, %456 : vector<1x128xi32>
    %458 = arith.andi %453, %457 : vector<1x128xi1>
    %c1_i32_167 = arith.constant 1 : i32
    %459 = vector.broadcast %c1_i32_167 : i32 to vector<1x128xi32>
    %460 = arith.addi %2, %459 : vector<1x128xi32>
    %c8_i32_168 = arith.constant 8 : i32
    %461 = vector.broadcast %c8_i32_168 : i32 to vector<1x128xi32>
    %462 = arith.cmpi slt, %460, %461 : vector<1x128xi32>
    %463 = arith.andi %458, %462 : vector<1x128xi1>
    %cst_169 = arith.constant 0.000000e+00 : f32
    %464 = vector.shape_cast %463 : vector<1x128xi1> to vector<1x128xi1>
    %465 = vector.broadcast %464 : vector<1x128xi1> to vector<16x128xi1>
    %466 = vector.broadcast %cst_169 : f32 to vector<16x128xf32>
    %467 = arith.select %465, %444, %466 : vector<16x128xi1>, vector<16x128xf32>
    %468 = vector.extract_strided_slice %244 {offsets = [0, 8], sizes = [16, 1], strides = [1, 1]} : vector<16x9xf32> to vector<16x1xf32>
    %469 = vector.broadcast %468 : vector<16x1xf32> to vector<16x128xf32>
    %470 = arith.mulf %467, %469 : vector<16x128xf32>
    %471 = arith.addf %443, %470 : vector<16x128xf32>
    %c0_170 = arith.constant 0 : index
    %c0_171 = arith.constant 0 : index
    %472 = vector.load %arg11[%c0_170, %c0_171] : memref<16x1xf32, #tpu.memory_space<vmem>>, vector<16x1xf32>
    %473 = vector.broadcast %472 : vector<16x1xf32> to vector<16x128xf32>
    %474 = arith.addf %471, %473 : vector<16x128xf32>
    %cst_172 = arith.constant 0.000000e+00 : f32
    %475 = vector.broadcast %cst_172 : f32 to vector<16x128xf32>
    %476 = arith.maximumf %243, %475 : vector<16x128xf32>
    %477 = arith.mulf %476, %474 : vector<16x128xf32>
    %c0_173 = arith.constant 0 : index
    %c0_174 = arith.constant 0 : index
    %478 = vector.load %arg12[%c0_173, %c0_174] : memref<8x16xf32, #tpu.memory_space<vmem>>, vector<8x16xf32>
    %cst_175 = arith.constant dense<0.000000e+00> : vector<8x128xf32>
    %479 = tpu.matmul %478, %477, %cst_175 {dimension_numbers = #tpu.dot_dimension_numbers<[1], [0], [0], [1], [0, 0, 1, 1], [], []>} : vector<8x16xf32>, vector<16x128xf32>, vector<8x128xf32> -> vector<8x128xf32>
    %c0_176 = arith.constant 0 : index
    %c0_177 = arith.constant 0 : index
    %480 = vector.load %arg13[%c0_176, %c0_177] : memref<8x1xf32, #tpu.memory_space<vmem>>, vector<8x1xf32>
    %481 = vector.broadcast %480 : vector<8x1xf32> to vector<8x128xf32>
    %482 = arith.addf %479, %481 : vector<8x128xf32>
    %c0_178 = arith.constant 0 : index
    %c0_179 = arith.constant 0 : index
    %483 = vector.load %arg14[%c0_178, %c0_179] : memref<8x128xf32, #tpu.memory_space<vmem>>, vector<8x128xf32>
    tpu.vector_store %arg14[%c0_178, %c0_179], %482 {strides = array<i32>} : memref<8x128xf32, #tpu.memory_space<vmem>>, vector<8x128xf32>,
    return
  }
  func.func @transform_0(%arg0: i32) -> (i32, i32) {
    %c0_i32 = arith.constant 0 : i32
    %c0_i32_0 = arith.constant 0 : i32
    return %c0_i32, %arg0 : i32, i32
  }
  func.func @transform_1(%arg0: i32) -> (i32, i32) {
    %c0_i32 = arith.constant 0 : i32
    %c0_i32_0 = arith.constant 0 : i32
    %c0_i32_1 = arith.constant 0 : i32
    return %c0_i32, %c0_i32_0 : i32, i32
  }
  func.func @transform_2(%arg0: i32) -> (i32, i32) {
    %c0_i32 = arith.constant 0 : i32
    %c0_i32_0 = arith.constant 0 : i32
    %c0_i32_1 = arith.constant 0 : i32
    return %c0_i32, %c0_i32_0 : i32, i32
  }
  func.func @transform_3(%arg0: i32) -> (i32, i32) {
    %c0_i32 = arith.constant 0 : i32
    %c0_i32_0 = arith.constant 0 : i32
    %c0_i32_1 = arith.constant 0 : i32
    return %c0_i32, %c0_i32_0 : i32, i32
  }
  func.func @transform_4(%arg0: i32) -> (i32, i32) {
    %c0_i32 = arith.constant 0 : i32
    %c0_i32_0 = arith.constant 0 : i32
    %c0_i32_1 = arith.constant 0 : i32
    return %c0_i32, %c0_i32_0 : i32, i32
  }
  func.func @transform_5(%arg0: i32) -> (i32, i32) {
    %c0_i32 = arith.constant 0 : i32
    %c0_i32_0 = arith.constant 0 : i32
    %c0_i32_1 = arith.constant 0 : i32
    return %c0_i32, %c0_i32_0 : i32, i32
  }
  func.func @transform_6(%arg0: i32) -> (i32, i32) {
    %c0_i32 = arith.constant 0 : i32
    %c0_i32_0 = arith.constant 0 : i32
    %c0_i32_1 = arith.constant 0 : i32
    return %c0_i32, %c0_i32_0 : i32, i32
  }
  func.func @transform_7(%arg0: i32) -> (i32, i32) {
    %c0_i32 = arith.constant 0 : i32
    %c0_i32_0 = arith.constant 0 : i32
    %c0_i32_1 = arith.constant 0 : i32
    return %c0_i32, %c0_i32_0 : i32, i32
  }
  func.func @transform_8(%arg0: i32) -> (i32, i32) {
    %c0_i32 = arith.constant 0 : i32
    %c0_i32_0 = arith.constant 0 : i32
    %c0_i32_1 = arith.constant 0 : i32
    return %c0_i32, %c0_i32_0 : i32, i32
  }
  func.func @transform_9(%arg0: i32) -> (i32, i32) {
    %c0_i32 = arith.constant 0 : i32
    %c0_i32_0 = arith.constant 0 : i32
    %c0_i32_1 = arith.constant 0 : i32
    return %c0_i32, %c0_i32_0 : i32, i32
  }
  func.func @transform_10(%arg0: i32) -> (i32, i32) {
    %c0_i32 = arith.constant 0 : i32
    %c0_i32_0 = arith.constant 0 : i32
    %c0_i32_1 = arith.constant 0 : i32
    return %c0_i32, %c0_i32_0 : i32, i32
  }
  func.func @transform_11(%arg0: i32) -> (i32, i32) {
    %c0_i32 = arith.constant 0 : i32
    %c0_i32_0 = arith.constant 0 : i32
    %c0_i32_1 = arith.constant 0 : i32
    return %c0_i32, %c0_i32_0 : i32, i32
  }
  func.func @transform_12(%arg0: i32) -> (i32, i32) {
    %c0_i32 = arith.constant 0 : i32
    %c0_i32_0 = arith.constant 0 : i32
    %c0_i32_1 = arith.constant 0 : i32
    return %c0_i32, %c0_i32_0 : i32, i32
  }
  func.func @transform_13(%arg0: i32) -> (i32, i32) {
    %c0_i32 = arith.constant 0 : i32
    %c0_i32_0 = arith.constant 0 : i32
    return %c0_i32, %arg0 : i32, i32
  }
}

</mosaic_0001>

<llo_original>
// kernel: tpu_custom_call.1
$region0: #{tpu_custom_call.1}
  #allocation0 [shape = 'u32[]', space=smem, size = 0x4, offset = 0x4, fixed_abs, tag = 'smem constant byte address 0x4 - core index']
  #allocation1 [shape = 'u32[144,128]{1,0:T(1,128)}', space=vmem, size = 0x12000, scoped, tag = 'internal scratch']
  %s0 = inlined_call_operand.vmem [shape: f32[8,128], index: 0, kind: input, shape index: {}]
  %s1 = inlined_call_operand.vmem [shape: s32[1,128], index: 1, kind: input, shape index: {}]
  %s2 = inlined_call_operand.vmem [shape: s32[1,128], index: 2, kind: input, shape index: {}]
  %s3 = inlined_call_operand.vmem [shape: f32[16,8], index: 3, kind: input, shape index: {}]
  %s4 = inlined_call_operand.vmem [shape: f32[16,8], index: 4, kind: input, shape index: {}]
  %s5 = inlined_call_operand.vmem [shape: f32[16,1], index: 5, kind: input, shape index: {}]
  %s6 = inlined_call_operand.vmem [shape: f32[16,1], index: 6, kind: input, shape index: {}]
  %s7 = inlined_call_operand.vmem [shape: f32[16,9], index: 7, kind: input, shape index: {}]
  %s8 = inlined_call_operand.vmem [shape: f32[16,9], index: 8, kind: input, shape index: {}]
  %s9 = inlined_call_operand.vmem [shape: f32[16,1], index: 9, kind: input, shape index: {}]
  %s10 = inlined_call_operand.vmem [shape: f32[16,1], index: 10, kind: input, shape index: {}]
  %s11 = inlined_call_operand.vmem [shape: f32[8,16], index: 11, kind: input, shape index: {}]
  %s12 = inlined_call_operand.vmem [shape: f32[8,1], index: 12, kind: input, shape index: {}]
  %s13 = inlined_call_operand.hbm [shape: f32[8,128], index: 13, kind: output, shape index: {}]
  %s14 = sld [smem:[#allocation0]]
  $region62: #{tpu_custom_call.1} parent=0
    _
  %s16 = ssub.s32 1, %s14
  %s17 = scalar_select 0, %s16, %s14
  $region1: #{tpu_custom_call.1} parent=0
    #allocation2 [shape = 'u8[4096]{0}', space=vmem, size = 0x1000, scoped, tag = 'output window, operand 0, single buffered']
    #allocation3 [shape = 's32[1]{0}', space=sflag, size = 0x4, scoped, tag = 'scoped memory for tpu_custom_call.1']
    %18 = vsyncpa [#allocation3], 0
    // Predicated region
    $region2: #{tpu_custom_call.1} parent=1 // pred_check
      _
    $region3: #{tpu_custom_call.1} parent=1 // pred_check_branch
      %20 = sbr.rel (0) target = $region5
    $region4: #{tpu_custom_call.1} parent=1 // pred_region
      _
    $region5: #{tpu_custom_call.1} parent=1 // pred_fallthru
      _
    // Predicated region
    $region6: #{tpu_custom_call.1} parent=1 // pred_check
      _
    $region7: #{tpu_custom_call.1} parent=1 // pred_check_branch
      %22 = sbr.rel (0) target = $region9
    $region8: #{tpu_custom_call.1} parent=1 // pred_region
      _
    $region9: #{tpu_custom_call.1} parent=1 // pred_fallthru
      _
    // Predicated region
    $region10: #{tpu_custom_call.1} parent=1 // pred_check
      _
    $region11: #{tpu_custom_call.1} parent=1 // pred_check_branch
      %24 = sbr.rel (0) target = $region13
    $region12: #{tpu_custom_call.1} parent=1 // pred_region
      _
    $region13: #{tpu_custom_call.1} parent=1 // pred_fallthru
      _
    // Predicated region
    $region14: #{tpu_custom_call.1} parent=1 // pred_check
      _
    $region15: #{tpu_custom_call.1} parent=1 // pred_check_branch
      %26 = sbr.rel (0) target = $region17
    $region16: #{tpu_custom_call.1} parent=1 // pred_region
      _
    $region17: #{tpu_custom_call.1} parent=1 // pred_fallthru
      _
    // Predicated region
    $region18: #{tpu_custom_call.1} parent=1 // pred_check
      _
    $region19: #{tpu_custom_call.1} parent=1 // pred_check_branch
      %28 = sbr.rel (0) target = $region21
    $region20: #{tpu_custom_call.1} parent=1 // pred_region
      _
    $region21: #{tpu_custom_call.1} parent=1 // pred_fallthru
      _
    // Predicated region
    $region22: #{tpu_custom_call.1} parent=1 // pred_check
      _
    $region23: #{tpu_custom_call.1} parent=1 // pred_check_branch
      %30 = sbr.rel (0) target = $region25
    $region24: #{tpu_custom_call.1} parent=1 // pred_region
      _
    $region25: #{tpu_custom_call.1} parent=1 // pred_fallthru
      _
    // Predicated region
    $region26: #{tpu_custom_call.1} parent=1 // pred_check
      _
    $region27: #{tpu_custom_call.1} parent=1 // pred_check_branch
      %32 = sbr.rel (0) target = $region29
    $region28: #{tpu_custom_call.1} parent=1 // pred_region
      _
    $region29: #{tpu_custom_call.1} parent=1 // pred_fallthru
      _
    // Predicated region
    $region30: #{tpu_custom_call.1} parent=1 // pred_check
      _
    $region31: #{tpu_custom_call.1} parent=1 // pred_check_branch
      %34 = sbr.rel (0) target = $region33
    $region32: #{tpu_custom_call.1} parent=1 // pred_region
      _
    $region33: #{tpu_custom_call.1} parent=1 // pred_fallthru
      _
    // Predicated region
    $region34: #{tpu_custom_call.1} parent=1 // pred_check
      _
    $region35: #{tpu_custom_call.1} parent=1 // pred_check_branch
      %36 = sbr.rel (0) target = $region37
    $region36: #{tpu_custom_call.1} parent=1 // pred_region
      _
    $region37: #{tpu_custom_call.1} parent=1 // pred_fallthru
      _
    // Predicated region
    $region38: #{tpu_custom_call.1} parent=1 // pred_check
      _
    $region39: #{tpu_custom_call.1} parent=1 // pred_check_branch
      %38 = sbr.rel (0) target = $region41
    $region40: #{tpu_custom_call.1} parent=1 // pred_region
      _
    $region41: #{tpu_custom_call.1} parent=1 // pred_fallthru
      _
    // Predicated region
    $region42: #{tpu_custom_call.1} parent=1 // pred_check
      _
    $region43: #{tpu_custom_call.1} parent=1 // pred_check_branch
      %40 = sbr.rel (0) target = $region45
    $region44: #{tpu_custom_call.1} parent=1 // pred_region
      _
    $region45: #{tpu_custom_call.1} parent=1 // pred_fallthru
      _
    // Predicated region
    $region46: #{tpu_custom_call.1} parent=1 // pred_check
      _
    $region47: #{tpu_custom_call.1} parent=1 // pred_check_branch
      %42 = sbr.rel (0) target = $region49
    $region48: #{tpu_custom_call.1} parent=1 // pred_region
      _
    $region49: #{tpu_custom_call.1} parent=1 // pred_fallthru
      _
    // Predicated region
    $region50: #{tpu_custom_call.1} parent=1 // pred_check
      _
    $region51: #{tpu_custom_call.1} parent=1 // pred_check_branch
      %44 = sbr.rel (0) target = $region53
    $region52: #{tpu_custom_call.1} parent=1 // pred_region
      _
    $region53: #{tpu_custom_call.1} parent=1 // pred_fallthru
      _
    %v45 = vld [vmem:[%s0] sm:$0xff]
    %v46 = vld [vmem:[%s1] sm:$0x1]
    %v47 = vld [vmem:[%s2] sm:$0x1]
    %v48 = vld [vmem:[%s3] sm:$0xff]
    %v49 = vld [vmem:[%s3 + $0x8] sm:$0xff]
    %v50 = vld [vmem:[%s5] sm:$0xff]
    %v51 = vld [vmem:[%s5 + $0x8] sm:$0xff]
    %53 = vset.pattern.permute.xlu0 0
    %54 = vperm.xlu0 %53, %v50
    %v55 = vpop.permute.xlu0 %54
    %58 = vset.pattern.permute.xlu0 0
    %59 = vperm.xlu0 %58, %v51
    %v60 = vpop.permute.xlu0 %59
    %vm62 = vcmask 64512
    %v64 = vsel %vm62, %v48, 0
    %v67 = vsel %vm62, %v49, 0
    %69 = vmatprep.subr.mxu0 0.0
    %70 = vmatpush1.msra.mxu0 0.0
    %71 = vmatprep.subr.mxu0 0.0
    %72 = vmatpush1.msra.mxu0 0.0
    %73 = vmatprep.subr.mxu0 0.0
    %74 = vmatpush1.msra.mxu0 0.0
    %75 = vmatprep.subr.mxu0 0.0
    %76 = vmatpush1.msra.mxu0 0.0
    %77 = vmatprep.subr.mxu0 0.0
    %78 = vmatpush1.msra.mxu0 0.0
    %79 = vmatprep.subr.mxu0 0.0
    %80 = vmatpush1.msra.mxu0 0.0
    %81 = vmatprep.subr.mxu0 0.0
    %82 = vmatpush1.msra.mxu0 0.0
    %83 = vmatprep.subr.mxu0 0.0
    %84 = vmatpush1.msra.mxu0 0.0
    %85 = vmatprep.subr.mxu0 0.0
    %86 = vmatpush1.msra.mxu0 0.0
    %87 = vmatprep.subr.mxu0 0.0
    %88 = vmatpush1.msra.mxu0 0.0
    %89 = vmatprep.subr.mxu0 0.0
    %90 = vmatpush1.msra.mxu0 0.0
    %91 = vmatprep.subr.mxu0 0.0
    %92 = vmatpush1.msra.mxu0 0.0
    %93 = vmatprep.subr.mxu0 0.0
    %94 = vmatpush1.msra.mxu0 0.0
    %95 = vmatprep.subr.mxu0 0.0
    %96 = vmatpush1.msra.mxu0 0.0
    %97 = vmatprep.subr.mxu0 0.0
    %98 = vmatpush1.msra.mxu0 0.0
    %99 = vmatprep.subr.mxu0 0.0
    %100 = vmatpush1.msra.mxu0 %v45
    %101 = vmatprep.subr.mxu0 0.0
    %102 = vmatpush2.msra.mxu0 0.0
    %103 = vmatprep.subr.mxu0 0.0
    %104 = vmatpush2.msra.mxu0 0.0
    %105 = vmatprep.subr.mxu0 0.0
    %106 = vmatpush2.msra.mxu0 0.0
    %107 = vmatprep.subr.mxu0 0.0
    %108 = vmatpush2.msra.mxu0 0.0
    %109 = vmatprep.subr.mxu0 0.0
    %110 = vmatpush2.msra.mxu0 0.0
    %111 = vmatprep.subr.mxu0 0.0
    %112 = vmatpush2.msra.mxu0 0.0
    %113 = vmatprep.subr.mxu0 0.0
    %114 = vmatpush2.msra.mxu0 0.0
    %115 = vmatprep.subr.mxu0 0.0
    %116 = vmatpush2.msra.mxu0 0.0
    %117 = vmatprep.subr.mxu0 0.0
    %118 = vmatpush2.msra.mxu0 0.0
    %119 = vmatprep.subr.mxu0 0.0
    %120 = vmatpush2.msra.mxu0 0.0
    %121 = vmatprep.subr.mxu0 0.0
    %122 = vmatpush2.msra.mxu0 0.0
    %123 = vmatprep.subr.mxu0 0.0
    %124 = vmatpush2.msra.mxu0 0.0
    %125 = vmatprep.subr.mxu0 0.0
    %126 = vmatpush2.msra.mxu0 0.0
    %127 = vmatprep.subr.mxu0 0.0
    %128 = vmatpush2.msra.mxu0 0.0
    %129 = vmatprep.subr.mxu0 0.0
    %130 = vmatpush2.msra.mxu0 0.0
    %131 = vmatprep.subr.mxu0 0.0
    %132 = vmatpush2.msra.mxu0 0.0
    %133 = vmatprep.mubr.f32.mxu0 0.0
    %134 = vmatmul.mubr.f32.gmra.mxu0 %v64
    %v135 = vpop.f32.mrf.mxu0
    %v136 = vadd.f32 %v55, %v135
    %v137 = vpop.f32.mrf.mxu0
    %138 = vmatprep.mubr.f32.mxu0 0.0
    %139 = vmatmul.mubr.f32.gmra.mxu0 %v67
    %v140 = vpop.f32.mrf.mxu0
    %v141 = vadd.f32 %v60, %v140
    %v142 = vpop.f32.mrf.mxu0
    %143 = vdwg.mxu0
    %v144 = vld [vmem:[%s4] sm:$0xff]
    %v145 = vld [vmem:[%s4 + $0x8] sm:$0xff]
    %v146 = vld [vmem:[%s6] sm:$0xff]
    %v147 = vld [vmem:[%s6 + $0x8] sm:$0xff]
    %149 = vset.pattern.permute.xlu0 0
    %150 = vperm.xlu0 %149, %v146
    %v151 = vpop.permute.xlu0 %150
    %154 = vset.pattern.permute.xlu0 0
    %155 = vperm.xlu0 %154, %v147
    %v156 = vpop.permute.xlu0 %155
    %v159 = vsel %vm62, %v144, 0
    %v162 = vsel %vm62, %v145, 0
    %164 = vmatprep.subr.mxu0 0.0
    %165 = vmatpush1.msra.mxu0 0.0
    %166 = vmatprep.subr.mxu0 0.0
    %167 = vmatpush1.msra.mxu0 0.0
    %168 = vmatprep.subr.mxu0 0.0
    %169 = vmatpush1.msra.mxu0 0.0
    %170 = vmatprep.subr.mxu0 0.0
    %171 = vmatpush1.msra.mxu0 0.0
    %172 = vmatprep.subr.mxu0 0.0
    %173 = vmatpush1.msra.mxu0 0.0
    %174 = vmatprep.subr.mxu0 0.0
    %175 = vmatpush1.msra.mxu0 0.0
    %176 = vmatprep.subr.mxu0 0.0
    %177 = vmatpush1.msra.mxu0 0.0
    %178 = vmatprep.subr.mxu0 0.0
    %179 = vmatpush1.msra.mxu0 0.0
    %180 = vmatprep.subr.mxu0 0.0
    %181 = vmatpush1.msra.mxu0 0.0
    %182 = vmatprep.subr.mxu0 0.0
    %183 = vmatpush1.msra.mxu0 0.0
    %184 = vmatprep.subr.mxu0 0.0
    %185 = vmatpush1.msra.mxu0 0.0
    %186 = vmatprep.subr.mxu0 0.0
    %187 = vmatpush1.msra.mxu0 0.0
    %188 = vmatprep.subr.mxu0 0.0
    %189 = vmatpush1.msra.mxu0 0.0
    %190 = vmatprep.subr.mxu0 0.0
    %191 = vmatpush1.msra.mxu0 0.0
    %192 = vmatprep.subr.mxu0 0.0
    %193 = vmatpush1.msra.mxu0 0.0
    %194 = vmatprep.subr.mxu0 0.0
    %195 = vmatpush1.msra.mxu0 %v45
    %196 = vmatprep.subr.mxu0 0.0
    %197 = vmatpush2.msra.mxu0 0.0
    %198 = vmatprep.subr.mxu0 0.0
    %199 = vmatpush2.msra.mxu0 0.0
    %200 = vmatprep.subr.mxu0 0.0
    %201 = vmatpush2.msra.mxu0 0.0
    %202 = vmatprep.subr.mxu0 0.0
    %203 = vmatpush2.msra.mxu0 0.0
    %204 = vmatprep.subr.mxu0 0.0
    %205 = vmatpush2.msra.mxu0 0.0
    %206 = vmatprep.subr.mxu0 0.0
    %207 = vmatpush2.msra.mxu0 0.0
    %208 = vmatprep.subr.mxu0 0.0
    %209 = vmatpush2.msra.mxu0 0.0
    %210 = vmatprep.subr.mxu0 0.0
    %211 = vmatpush2.msra.mxu0 0.0
    %212 = vmatprep.subr.mxu0 0.0
    %213 = vmatpush2.msra.mxu0 0.0
    %214 = vmatprep.subr.mxu0 0.0
    %215 = vmatpush2.msra.mxu0 0.0
    %216 = vmatprep.subr.mxu0 0.0
    %217 = vmatpush2.msra.mxu0 0.0
    %218 = vmatprep.subr.mxu0 0.0
    %219 = vmatpush2.msra.mxu0 0.0
    %220 = vmatprep.subr.mxu0 0.0
    %221 = vmatpush2.msra.mxu0 0.0
    %222 = vmatprep.subr.mxu0 0.0
    %223 = vmatpush2.msra.mxu0 0.0
    %224 = vmatprep.subr.mxu0 0.0
    %225 = vmatpush2.msra.mxu0 0.0
    %226 = vmatprep.subr.mxu0 0.0
    %227 = vmatpush2.msra.mxu0 0.0
    %228 = vmatprep.mubr.f32.mxu0 0.0
    %229 = vmatmul.mubr.f32.gmra.mxu0 %v159
    %v230 = vpop.f32.mrf.mxu0
    %v231 = vadd.f32 %v151, %v230
    %v232 = vpop.f32.mrf.mxu0
    %233 = vmatprep.mubr.f32.mxu0 0.0
    %234 = vmatmul.mubr.f32.gmra.mxu0 %v162
    %v235 = vpop.f32.mrf.mxu0
    %v236 = vadd.f32 %v156, %v235
    %v237 = vpop.f32.mrf.mxu0
    %238 = vdwg.mxu0
    %v239 = vld [vmem:[%s7] sm:$0xff]
    %v240 = vld [vmem:[%s7 + $0x8] sm:$0xff]
    %242 = vset.pattern.permute.xlu0 4
    %243 = vperm.xlu0 %242, %v239
    %v244 = vpop.permute.xlu0 %243
    %247 = vset.pattern.permute.xlu0 4
    %248 = vperm.xlu0 %247, %v240
    %v249 = vpop.permute.xlu0 %248
    %v251 = vmul.f32 %v136, %v244
    %v252 = vmul.f32 %v141, %v249
    %253 = vrot.lane.b32.xlu0 %v136, 9
    %v254 = vpop.permute.xlu0 %253
    %255 = vrot.lane.b32.xlu0 %v141, 9
    %v256 = vpop.permute.xlu0 %255
    %v257 = vadd.s32 %v46, 4294967295
    %vm258 = vcmp.ge.s32.totalorder %v257, 0
    %vm259 = vcmp.lt.s32.totalorder %v257, 8
    %vm260 = vmand %vm258, %vm259
    %v261 = vadd.s32 %v47, 4294967295
    %vm262 = vcmp.ge.s32.totalorder %v261, 0
    %vm263 = vmand %vm260, %vm262
    %vm264 = vcmp.lt.s32.totalorder %v261, 8
    %vm265 = vmand %vm263, %vm264
    %v266 = vsel %vm265, 1, 0
    %v267 = vlaneseq
    %v268 = vshrl.u32 %v267, 7
    %v269 = vsub.s32 0, %v268
    %v270 = vrot.slane %v266, %v269
    %vm271 = vcmp.eq.s32.totalorder %v270, 1
    %v272 = vsel %vm271, %v254, 0.0
    %v273 = vsel %vm271, %v256, 0.0
    %274 = vset.pattern.permute.xlu0 0
    %275 = vperm.xlu0 %274, %v239
    %v276 = vpop.permute.xlu0 %275
    %278 = vset.pattern.permute.xlu0 0
    %279 = vperm.xlu0 %278, %v240
    %v280 = vpop.permute.xlu0 %279
    %v282 = vmul.f32 %v272, %v276
    %v283 = vmul.f32 %v273, %v280
    %v284 = vadd.f32 %v251, %v282
    %v285 = vadd.f32 %v252, %v283
    %286 = vrot.lane.b32.xlu0 %v136, 8
    %v287 = vpop.permute.xlu0 %286
    %288 = vrot.lane.b32.xlu0 %v141, 8
    %v289 = vpop.permute.xlu0 %288
    %vm290 = vcmp.ge.s32.totalorder %v47, 0
    %vm291 = vmand %vm260, %vm290
    %vm292 = vcmp.lt.s32.totalorder %v47, 8
    %vm293 = vmand %vm291, %vm292
    %v294 = vsel %vm293, 1, 0
    %v295 = vlaneseq
    %v296 = vshrl.u32 %v295, 7
    %v297 = vsub.s32 0, %v296
    %v298 = vrot.slane %v294, %v297
    %vm299 = vcmp.eq.s32.totalorder %v298, 1
    %v300 = vsel %vm299, %v287, 0.0
    %v301 = vsel %vm299, %v289, 0.0
    %302 = vset.pattern.permute.xlu0 1
    %303 = vperm.xlu0 %302, %v239
    %v304 = vpop.permute.xlu0 %303
    %306 = vset.pattern.permute.xlu0 1
    %307 = vperm.xlu0 %306, %v240
    %v308 = vpop.permute.xlu0 %307
    %v310 = vmul.f32 %v300, %v304
    %v311 = vmul.f32 %v301, %v308
    %v312 = vadd.f32 %v284, %v310
    %v313 = vadd.f32 %v285, %v311
    %314 = vrot.lane.b32.xlu0 %v136, 7
    %v315 = vpop.permute.xlu0 %314
    %316 = vrot.lane.b32.xlu0 %v141, 7
    %v317 = vpop.permute.xlu0 %316
    %v318 = vadd.s32 %v47, 1
    %vm319 = vcmp.ge.s32.totalorder %v318, 0
    %vm320 = vmand %vm260, %vm319
    %vm321 = vcmp.lt.s32.totalorder %v318, 8
    %vm322 = vmand %vm320, %vm321
    %v323 = vsel %vm322, 1, 0
    %v324 = vlaneseq
    %v325 = vshrl.u32 %v324, 7
    %v326 = vsub.s32 0, %v325
    %v327 = vrot.slane %v323, %v326
    %vm328 = vcmp.eq.s32.totalorder %v327, 1
    %v329 = vsel %vm328, %v315, 0.0
    %v330 = vsel %vm328, %v317, 0.0
    %331 = vset.pattern.permute.xlu0 2
    %332 = vperm.xlu0 %331, %v239
    %v333 = vpop.permute.xlu0 %332
    %335 = vset.pattern.permute.xlu0 2
    %336 = vperm.xlu0 %335, %v240
    %v337 = vpop.permute.xlu0 %336
    %v339 = vmul.f32 %v329, %v333
    %v340 = vmul.f32 %v330, %v337
    %v341 = vadd.f32 %v312, %v339
    %v342 = vadd.f32 %v313, %v340
    %343 = vrot.lane.b32.xlu0 %v136, 1
    %v344 = vpop.permute.xlu0 %343
    %345 = vrot.lane.b32.xlu0 %v141, 1
    %v346 = vpop.permute.xlu0 %345
    %vm347 = vcmp.ge.s32.totalorder %v46, 0
    %vm348 = vcmp.lt.s32.totalorder %v46, 8
    %vm349 = vmand %vm347, %vm348
    %vm350 = vmand %vm349, %vm262
    %vm351 = vmand %vm350, %vm264
    %v352 = vsel %vm351, 1, 0
    %v353 = vlaneseq
    %v354 = vshrl.u32 %v353, 7
    %v355 = vsub.s32 0, %v354
    %v356 = vrot.slane %v352, %v355
    %vm357 = vcmp.eq.s32.totalorder %v356, 1
    %v358 = vsel %vm357, %v344, 0.0
    %v359 = vsel %vm357, %v346, 0.0
    %360 = vset.pattern.permute.xlu0 3
    %361 = vperm.xlu0 %360, %v239
    %v362 = vpop.permute.xlu0 %361
    %364 = vset.pattern.permute.xlu0 3
    %365 = vperm.xlu0 %364, %v240
    %v366 = vpop.permute.xlu0 %365
    %v368 = vmul.f32 %v358, %v362
    %v369 = vmul.f32 %v359, %v366
    %v370 = vadd.f32 %v341, %v368
    %v371 = vadd.f32 %v342, %v369
    %372 = vrot.lane.b32.xlu0 %v136, 127
    %v373 = vpop.permute.xlu0 %372
    %374 = vrot.lane.b32.xlu0 %v141, 127
    %v375 = vpop.permute.xlu0 %374
    %vm376 = vmand %vm349, %vm319
    %vm377 = vmand %vm376, %vm321
    %v378 = vsel %vm377, 1, 0
    %v379 = vlaneseq
    %v380 = vshrl.u32 %v379, 7
    %v381 = vsub.s32 0, %v380
    %v382 = vrot.slane %v378, %v381
    %vm383 = vcmp.eq.s32.totalorder %v382, 1
    %v384 = vsel %vm383, %v373, 0.0
    %v385 = vsel %vm383, %v375, 0.0
    %386 = vset.pattern.permute.xlu0 5
    %387 = vperm.xlu0 %386, %v239
    %v388 = vpop.permute.xlu0 %387
    %390 = vset.pattern.permute.xlu0 5
    %391 = vperm.xlu0 %390, %v240
    %v392 = vpop.permute.xlu0 %391
    %v394 = vmul.f32 %v384, %v388
    %v395 = vmul.f32 %v385, %v392
    %v396 = vadd.f32 %v370, %v394
    %v397 = vadd.f32 %v371, %v395
    %398 = vrot.lane.b32.xlu0 %v136, 121
    %v399 = vpop.permute.xlu0 %398
    %400 = vrot.lane.b32.xlu0 %v141, 121
    %v401 = vpop.permute.xlu0 %400
    %v402 = vadd.s32 %v46, 1
    %vm403 = vcmp.ge.s32.totalorder %v402, 0
    %vm404 = vcmp.lt.s32.totalorder %v402, 8
    %vm405 = vmand %vm403, %vm404
    %vm406 = vmand %vm405, %vm262
    %vm407 = vmand %vm406, %vm264
    %v408 = vsel %vm407, 1, 0
    %v409 = vlaneseq
    %v410 = vshrl.u32 %v409, 7
    %v411 = vsub.s32 0, %v410
    %v412 = vrot.slane %v408, %v411
    %vm413 = vcmp.eq.s32.totalorder %v412, 1
    %v414 = vsel %vm413, %v399, 0.0
    %v415 = vsel %vm413, %v401, 0.0
    %416 = vset.pattern.permute.xlu0 6
    %417 = vperm.xlu0 %416, %v239
    %v418 = vpop.permute.xlu0 %417
    %420 = vset.pattern.permute.xlu0 6
    %421 = vperm.xlu0 %420, %v240
    %v422 = vpop.permute.xlu0 %421
    %v424 = vmul.f32 %v414, %v418
    %v425 = vmul.f32 %v415, %v422
    %v426 = vadd.f32 %v396, %v424
    %v427 = vadd.f32 %v397, %v425
    %428 = vrot.lane.b32.xlu0 %v136, 120
    %v429 = vpop.permute.xlu0 %428
    %430 = vrot.lane.b32.xlu0 %v141, 120
    %v431 = vpop.permute.xlu0 %430
    %vm432 = vmand %vm405, %vm290
    %vm433 = vmand %vm432, %vm292
    %v434 = vsel %vm433, 1, 0
    %v435 = vlaneseq
    %v436 = vshrl.u32 %v435, 7
    %v437 = vsub.s32 0, %v436
    %v438 = vrot.slane %v434, %v437
    %vm439 = vcmp.eq.s32.totalorder %v438, 1
    %v440 = vsel %vm439, %v429, 0.0
    %v441 = vsel %vm439, %v431, 0.0
    %442 = vset.pattern.permute.xlu0 7
    %443 = vperm.xlu0 %442, %v239
    %v444 = vpop.permute.xlu0 %443
    %446 = vset.pattern.permute.xlu0 7
    %447 = vperm.xlu0 %446, %v240
    %v448 = vpop.permute.xlu0 %447
    %v450 = vmul.f32 %v440, %v444
    %v451 = vmul.f32 %v441, %v448
    %v452 = vadd.f32 %v426, %v450
    %v453 = vadd.f32 %v427, %v451
    %454 = vrot.lane.b32.xlu0 %v136, 119
    %v455 = vpop.permute.xlu0 %454
    %456 = vrot.lane.b32.xlu0 %v141, 119
    %v457 = vpop.permute.xlu0 %456
    %vm458 = vmand %vm405, %vm319
    %vm459 = vmand %vm458, %vm321
    %v460 = vsel %vm459, 1, 0
    %v461 = vlaneseq
    %v462 = vshrl.u32 %v461, 7
    %v463 = vsub.s32 0, %v462
    %v464 = vrot.slane %v460, %v463
    %vm465 = vcmp.eq.s32.totalorder %v464, 1
    %v466 = vsel %vm465, %v455, 0.0
    %v467 = vsel %vm465, %v457, 0.0
    %468 = vset.pattern.permute.xlu0 8
    %469 = vperm.xlu0 %468, %v239
    %v470 = vpop.permute.xlu0 %469
    %472 = vset.pattern.permute.xlu0 8
    %473 = vperm.xlu0 %472, %v240
    %v474 = vpop.permute.xlu0 %473
    %v476 = vmul.f32 %v466, %v470
    %v477 = vmul.f32 %v467, %v474
    %v478 = vadd.f32 %v452, %v476
    %v479 = vadd.f32 %v453, %v477
    %v480 = vld [vmem:[%s9] sm:$0xff]
    %v481 = vld [vmem:[%s9 + $0x8] sm:$0xff]
    %483 = vset.pattern.permute.xlu0 0
    %484 = vperm.xlu0 %483, %v480
    %v485 = vpop.permute.xlu0 %484
    %488 = vset.pattern.permute.xlu0 0
    %489 = vperm.xlu0 %488, %v481
    %v490 = vpop.permute.xlu0 %489
    %v492 = vadd.f32 %v478, %v485
    %v493 = vadd.f32 %v479, %v490
    %v494 = vld [vmem:[%s8] sm:$0xff]
    %v495 = vld [vmem:[%s8 + $0x8] sm:$0xff]
    %497 = vset.pattern.permute.xlu0 4
    %498 = vperm.xlu0 %497, %v494
    %v499 = vpop.permute.xlu0 %498
    %502 = vset.pattern.permute.xlu0 4
    %503 = vperm.xlu0 %502, %v495
    %v504 = vpop.permute.xlu0 %503
    %v506 = vmul.f32 %v231, %v499
    %v507 = vmul.f32 %v236, %v504
    %508 = vrot.lane.b32.xlu0 %v231, 9
    %v509 = vpop.permute.xlu0 %508
    %510 = vrot.lane.b32.xlu0 %v236, 9
    %v511 = vpop.permute.xlu0 %510
    %v512 = vsel %vm271, %v509, 0.0
    %v513 = vsel %vm271, %v511, 0.0
    %514 = vset.pattern.permute.xlu0 0
    %515 = vperm.xlu0 %514, %v494
    %v516 = vpop.permute.xlu0 %515
    %518 = vset.pattern.permute.xlu0 0
    %519 = vperm.xlu0 %518, %v495
    %v520 = vpop.permute.xlu0 %519
    %v522 = vmul.f32 %v512, %v516
    %v523 = vmul.f32 %v513, %v520
    %v524 = vadd.f32 %v506, %v522
    %v525 = vadd.f32 %v507, %v523
    %526 = vrot.lane.b32.xlu0 %v231, 8
    %v527 = vpop.permute.xlu0 %526
    %528 = vrot.lane.b32.xlu0 %v236, 8
    %v529 = vpop.permute.xlu0 %528
    %v530 = vsel %vm299, %v527, 0.0
    %v531 = vsel %vm299, %v529, 0.0
    %532 = vset.pattern.permute.xlu0 1
    %533 = vperm.xlu0 %532, %v494
    %v534 = vpop.permute.xlu0 %533
    %536 = vset.pattern.permute.xlu0 1
    %537 = vperm.xlu0 %536, %v495
    %v538 = vpop.permute.xlu0 %537
    %v540 = vmul.f32 %v530, %v534
    %v541 = vmul.f32 %v531, %v538
    %v542 = vadd.f32 %v524, %v540
    %v543 = vadd.f32 %v525, %v541
    %544 = vrot.lane.b32.xlu0 %v231, 7
    %v545 = vpop.permute.xlu0 %544
    %546 = vrot.lane.b32.xlu0 %v236, 7
    %v547 = vpop.permute.xlu0 %546
    %v548 = vsel %vm328, %v545, 0.0
    %v549 = vsel %vm328, %v547, 0.0
    %550 = vset.pattern.permute.xlu0 2
    %551 = vperm.xlu0 %550, %v494
    %v552 = vpop.permute.xlu0 %551
    %554 = vset.pattern.permute.xlu0 2
    %555 = vperm.xlu0 %554, %v495
    %v556 = vpop.permute.xlu0 %555
    %v558 = vmul.f32 %v548, %v552
    %v559 = vmul.f32 %v549, %v556
    %v560 = vadd.f32 %v542, %v558
    %v561 = vadd.f32 %v543, %v559
    %562 = vrot.lane.b32.xlu0 %v231, 1
    %v563 = vpop.permute.xlu0 %562
    %564 = vrot.lane.b32.xlu0 %v236, 1
    %v565 = vpop.permute.xlu0 %564
    %v566 = vsel %vm357, %v563, 0.0
    %v567 = vsel %vm357, %v565, 0.0
    %568 = vset.pattern.permute.xlu0 3
    %569 = vperm.xlu0 %568, %v494
    %v570 = vpop.permute.xlu0 %569
    %572 = vset.pattern.permute.xlu0 3
    %573 = vperm.xlu0 %572, %v495
    %v574 = vpop.permute.xlu0 %573
    %v576 = vmul.f32 %v566, %v570
    %v577 = vmul.f32 %v567, %v574
    %v578 = vadd.f32 %v560, %v576
    %v579 = vadd.f32 %v561, %v577
    %580 = vrot.lane.b32.xlu0 %v231, 127
    %v581 = vpop.permute.xlu0 %580
    %582 = vrot.lane.b32.xlu0 %v236, 127
    %v583 = vpop.permute.xlu0 %582
    %v584 = vsel %vm383, %v581, 0.0
    %v585 = vsel %vm383, %v583, 0.0
    %586 = vset.pattern.permute.xlu0 5
    %587 = vperm.xlu0 %586, %v494
    %v588 = vpop.permute.xlu0 %587
    %590 = vset.pattern.permute.xlu0 5
    %591 = vperm.xlu0 %590, %v495
    %v592 = vpop.permute.xlu0 %591
    %v594 = vmul.f32 %v584, %v588
    %v595 = vmul.f32 %v585, %v592
    %v596 = vadd.f32 %v578, %v594
    %v597 = vadd.f32 %v579, %v595
    %598 = vrot.lane.b32.xlu0 %v231, 121
    %v599 = vpop.permute.xlu0 %598
    %600 = vrot.lane.b32.xlu0 %v236, 121
    %v601 = vpop.permute.xlu0 %600
    %v602 = vsel %vm413, %v599, 0.0
    %v603 = vsel %vm413, %v601, 0.0
    %604 = vset.pattern.permute.xlu0 6
    %605 = vperm.xlu0 %604, %v494
    %v606 = vpop.permute.xlu0 %605
    %608 = vset.pattern.permute.xlu0 6
    %609 = vperm.xlu0 %608, %v495
    %v610 = vpop.permute.xlu0 %609
    %v612 = vmul.f32 %v602, %v606
    %v613 = vmul.f32 %v603, %v610
    %v614 = vadd.f32 %v596, %v612
    %v615 = vadd.f32 %v597, %v613
    %616 = vrot.lane.b32.xlu0 %v231, 120
    %v617 = vpop.permute.xlu0 %616
    %618 = vrot.lane.b32.xlu0 %v236, 120
    %v619 = vpop.permute.xlu0 %618
    %v620 = vsel %vm439, %v617, 0.0
    %v621 = vsel %vm439, %v619, 0.0
    %622 = vset.pattern.permute.xlu0 7
    %623 = vperm.xlu0 %622, %v494
    %v624 = vpop.permute.xlu0 %623
    %626 = vset.pattern.permute.xlu0 7
    %627 = vperm.xlu0 %626, %v495
    %v628 = vpop.permute.xlu0 %627
    %v630 = vmul.f32 %v620, %v624
    %v631 = vmul.f32 %v621, %v628
    %v632 = vadd.f32 %v614, %v630
    %v633 = vadd.f32 %v615, %v631
    %634 = vrot.lane.b32.xlu0 %v231, 119
    %v635 = vpop.permute.xlu0 %634
    %636 = vrot.lane.b32.xlu0 %v236, 119
    %v637 = vpop.permute.xlu0 %636
    %v638 = vsel %vm465, %v635, 0.0
    %v639 = vsel %vm465, %v637, 0.0
    %640 = vset.pattern.permute.xlu0 8
    %641 = vperm.xlu0 %640, %v494
    %v642 = vpop.permute.xlu0 %641
    %644 = vset.pattern.permute.xlu0 8
    %645 = vperm.xlu0 %644, %v495
    %v646 = vpop.permute.xlu0 %645
    %v648 = vmul.f32 %v638, %v642
    %v649 = vmul.f32 %v639, %v646
    %v650 = vadd.f32 %v632, %v648
    %v651 = vadd.f32 %v633, %v649
    %v652 = vld [vmem:[%s10] sm:$0xff]
    %v653 = vld [vmem:[%s10 + $0x8] sm:$0xff]
    %655 = vset.pattern.permute.xlu0 0
    %656 = vperm.xlu0 %655, %v652
    %v657 = vpop.permute.xlu0 %656
    %660 = vset.pattern.permute.xlu0 0
    %661 = vperm.xlu0 %660, %v653
    %v662 = vpop.permute.xlu0 %661
    %v664 = vadd.f32 %v650, %v657
    %v665 = vadd.f32 %v651, %v662
    %v666 = vmax.f32 %v492, 0.0
    %v667 = vmax.f32 %v493, 0.0
    %v668 = vmul.f32 %v666, %v664
    %v669 = vmul.f32 %v667, %v665
    %v670 = vld [vmem:[%s11] sm:$0xff]
    %v671 = vld [vmem:[%s12] sm:$0xff]
    %673 = vset.pattern.permute.xlu0 0
    %674 = vperm.xlu0 %673, %v671
    %v675 = vpop.permute.xlu0 %674
    %vm677 = vcmask 130048
    %v679 = vsel %vm677, %v670, 0
    %681 = vmatprep.subr.mxu0 0.0
    %682 = vmatpush1.msra.mxu0 0.0
    %683 = vmatprep.subr.mxu0 0.0
    %684 = vmatpush1.msra.mxu0 0.0
    %685 = vmatprep.subr.mxu0 0.0
    %686 = vmatpush1.msra.mxu0 0.0
    %687 = vmatprep.subr.mxu0 0.0
    %688 = vmatpush1.msra.mxu0 0.0
    %689 = vmatprep.subr.mxu0 0.0
    %690 = vmatpush1.msra.mxu0 0.0
    %691 = vmatprep.subr.mxu0 0.0
    %692 = vmatpush1.msra.mxu0 0.0
    %693 = vmatprep.subr.mxu0 0.0
    %694 = vmatpush1.msra.mxu0 0.0
    %695 = vmatprep.subr.mxu0 0.0
    %696 = vmatpush1.msra.mxu0 0.0
    %697 = vmatprep.subr.mxu0 0.0
    %698 = vmatpush1.msra.mxu0 0.0
    %699 = vmatprep.subr.mxu0 0.0
    %700 = vmatpush1.msra.mxu0 0.0
    %701 = vmatprep.subr.mxu0 0.0
    %702 = vmatpush1.msra.mxu0 0.0
    %703 = vmatprep.subr.mxu0 0.0
    %704 = vmatpush1.msra.mxu0 0.0
    %705 = vmatprep.subr.mxu0 0.0
    %706 = vmatpush1.msra.mxu0 0.0
    %707 = vmatprep.subr.mxu0 0.0
    %708 = vmatpush1.msra.mxu0 0.0
    %709 = vmatprep.subr.mxu0 0.0
    %710 = vmatpush1.msra.mxu0 %v669
    %711 = vmatprep.subr.mxu0 0.0
    %712 = vmatpush1.msra.mxu0 %v668
    %713 = vmatprep.subr.mxu0 0.0
    %714 = vmatpush2.msra.mxu0 0.0
    %715 = vmatprep.subr.mxu0 0.0
    %716 = vmatpush2.msra.mxu0 0.0
    %717 = vmatprep.subr.mxu0 0.0
    %718 = vmatpush2.msra.mxu0 0.0
    %719 = vmatprep.subr.mxu0 0.0
    %720 = vmatpush2.msra.mxu0 0.0
    %721 = vmatprep.subr.mxu0 0.0
    %722 = vmatpush2.msra.mxu0 0.0
    %723 = vmatprep.subr.mxu0 0.0
    %724 = vmatpush2.msra.mxu0 0.0
    %725 = vmatprep.subr.mxu0 0.0
    %726 = vmatpush2.msra.mxu0 0.0
    %727 = vmatprep.subr.mxu0 0.0
    %728 = vmatpush2.msra.mxu0 0.0
    %729 = vmatprep.subr.mxu0 0.0
    %730 = vmatpush2.msra.mxu0 0.0
    %731 = vmatprep.subr.mxu0 0.0
    %732 = vmatpush2.msra.mxu0 0.0
    %733 = vmatprep.subr.mxu0 0.0
    %734 = vmatpush2.msra.mxu0 0.0
    %735 = vmatprep.subr.mxu0 0.0
    %736 = vmatpush2.msra.mxu0 0.0
    %737 = vmatprep.subr.mxu0 0.0
    %738 = vmatpush2.msra.mxu0 0.0
    %739 = vmatprep.subr.mxu0 0.0
    %740 = vmatpush2.msra.mxu0 0.0
    %741 = vmatprep.subr.mxu0 0.0
    %742 = vmatpush2.msra.mxu0 0.0
    %743 = vmatprep.subr.mxu0 0.0
    %744 = vmatpush2.msra.mxu0 0.0
    %745 = vmatprep.mubr.f32.mxu0 0.0
    %746 = vmatmul.mubr.f32.gmra.mxu0 %v679
    %v747 = vpop.f32.mrf.mxu0
    %v748 = vadd.f32 %v675, %v747
    %v749 = vpop.f32.mrf.mxu0
    %750 = vdwg.mxu0
    %751 = vst [vmem:[#allocation2] sm:$0xff] %v748
    // Predicated region
    $region54: #{tpu_custom_call.1} parent=1 // pred_check
      _
    $region55: #{tpu_custom_call.1} parent=1 // pred_check_branch
      %753 = sbr.rel (0) target = $region57
    $region56: #{tpu_custom_call.1} parent=1 // pred_region
      %s755 = ssub.s32 128, 128
      %756 = vsyncadd [#allocation3], %s755
      %s758 = sshll.u32 [#allocation2], 4
      %s759 = int_to_ptr.vmem [resolvable:$true] %s758
      %761 = dma.vmem_to_hbm [thread:$0]  %s759, 128, %s13, [#allocation3]
    $region57: #{tpu_custom_call.1} parent=1 // pred_fallthru
      _
    // Predicated region
    $region58: #{tpu_custom_call.1} parent=1 // pred_check
      _
    $region59: #{tpu_custom_call.1} parent=1 // pred_check_branch
      %763 = sbr.rel (0) target = $region61
    $region60: #{tpu_custom_call.1} parent=1 // pred_region
      %764 = dma.done [#allocation3], 128
    $region61: #{tpu_custom_call.1} parent=1 // pred_fallthru
      _
    %765 = vsyncpa [#allocation3], 1

</llo_original>
